<compile_context>
chip_gen: v6e
topology: v6e:2x2x1
jax: 0.10.0
libtpu: 0.0.40
codegen_flags: <defaults>
</compile_context>

<pallas_src>
import math

import jax
import jax.numpy as jnp
from jax import lax
from jax.experimental import pallas as pl
from jax.experimental.pallas import tpu as pltpu


def _round_up(v, m):
    return ((v + m - 1) // m) * m


def _vmem_caps():
    """(physical VMEM, scoped soft budget) in bytes, generation aware."""
    try:
        cap = int(getattr(pltpu.get_tpu_info(), "vmem_capacity_bytes"))
    except Exception:
        cap = 128 * 1024 * 1024
    if cap <= 64 * 1024 * 1024:       # v7x-class part (64 MiB physical)
        scoped = 24 * 1024 * 1024
    else:                             # v5e / v6e (128 MiB physical)
        scoped = 48 * 1024 * 1024
    return cap, scoped


def _step_bytes(p_blk, n, c_pad, tk, w_bytes):
    """Per-grid-step VMEM working set: double-buffered pipeline blocks + bf16
    feature scratch + live f32 temporaries (x_hat / feature / reductions)."""
    pipelined = (4 * n * c_pad            # x block (f32)
                 + 2 * 4 * c_pad          # gamma + beta (f32)
                 + w_bytes * c_pad * tk   # fc_bin block (bf16)
                 + 4 * n * c_pad          # feature out (f32)
                 + 4 * n * tk)            # logits out (f32)
    scratch = 2 * n * c_pad               # bf16 feature scratch (matmul operand)
    temps = 3 * 4 * n * c_pad             # live f32 intermediates headroom
    return p_blk * (2 * pipelined + scratch + temps)


def _pick_tiles(p, n, c_pad, k_pad, budget, w_bytes):
    """Pick (part block, class tile).  Keeps >= 2 part steps when possible so
    the "parallel" axis can shard across v7x's two TensorCores (harmless on the
    single-TC v5e/v6e)."""
    p_cap = max(1, p // 2)
    tk_opts = [t for t in (1024, 512, 256, 128) if t <= k_pad and k_pad % t == 0]
    if not tk_opts:
        tk_opts = [k_pad]
    for tk in tk_opts:
        for blk in range(p_cap, 0, -1):
            if p % blk == 0 and _step_bytes(blk, n, c_pad, tk, w_bytes) <= budget:
                return blk, tk
    # Fallback for extreme shapes: smallest tiles; vmem_limit is raised to match.
    return 1, tk_opts[-1]


def _make_kernel(eps_bn, eps_norm):
    eps_sq = eps_norm * eps_norm

    def kernel(x_ref, g_ref, b_ref, w_ref, feat_ref, logit_ref, fbf_ref):
        # x_ref:   (p_blk, n, c_pad)   g_ref/b_ref: (p_blk, 1, c_pad)
        # w_ref:   (p_blk, c_pad, tk)  (pre-normalized fc_bin, bf16)
        # fbf_ref: (p_blk, n, c_pad)   bf16 feature scratch (lives across k tiles)

        # BN + feature normalize once per part block (k tile 0); parts are
        # independent features of the (n, p*c) BatchNorm1d so per-part batch
        # statistics are exact.
        @pl.when(pl.program_id(1) == 0)
        def _():
            x = x_ref[...]
            mean = jnp.mean(x, axis=1, keepdims=True)
            var = jnp.mean(jnp.square(x - mean), axis=1, keepdims=True)
            x_hat = (x - mean) * lax.rsqrt(var + eps_bn)
            x_hat = x_hat * g_ref[...] + b_ref[...]
            # F.normalize(dim=-1): x / max(||x||, eps)  ==  x * rsqrt(max(||x||^2, eps^2))
            sumsq = jnp.sum(x_hat * x_hat, axis=-1, keepdims=True)
            feature = x_hat * lax.rsqrt(jnp.maximum(sumsq, eps_sq))
            feat_ref[...] = feature.astype(feat_ref.dtype)
            fbf_ref[...] = feature.astype(fbf_ref.dtype)

        # Per-part class matmul on the MXU: bf16 operands, f32 accumulation.
        logit_ref[...] = jnp.einsum(
            "pnc,pck->pnk", fbf_ref[...], w_ref[...],
            preferred_element_type=jnp.float32).astype(logit_ref.dtype)

    return kernel


def prepare_separate_bn_necks_params(gamma, beta, fc_bin, *, eps_norm=1e-12,
                                     matmul_dtype=jnp.bfloat16):
    """One-time parameter prep (hoisted out of the per-call hot path):
    pad gamma/beta/fc_bin to lane-dense widths, L2-normalize fc_bin along the
    channel axis (F.normalize(fc_bin, dim=1)) and cast it to the MXU dtype."""
    p, c, k = fc_bin.shape
    assert gamma.shape == (p * c,) and beta.shape == (p * c,)
    c_pad = _round_up(c, 128)
    k_pad = _round_up(k, 128)

    g_p = jnp.pad(gamma.astype(jnp.float32).reshape(p, 1, c),
                  ((0, 0), (0, 0), (0, c_pad - c)))
    b_p = jnp.pad(beta.astype(jnp.float32).reshape(p, 1, c),
                  ((0, 0), (0, 0), (0, c_pad - c)))

    w = fc_bin.astype(jnp.float32)
    w_sq = jnp.sum(w * w, axis=1, keepdims=True)
    w_n = w * lax.rsqrt(jnp.maximum(w_sq, eps_norm * eps_norm))
    w_p = jnp.pad(w_n, ((0, 0), (0, c_pad - c), (0, k_pad - k))).astype(matmul_dtype)

    return dict(gamma=g_p, beta=b_p, w=w_p, p=p, c=c, k=k,
                c_pad=c_pad, k_pad=k_pad)


def separate_bn_necks_apply(x, params, *, eps_bn=1e-5, eps_norm=1e-12):
    """SeparateBNNecks.forward (norm=True, parallel_BN1d=True) with prepared params."""
    # TODO(synk): BatchNorm1d running_mean/running_var momentum updates (a
    # training-mode side effect) are not materialized; only the forward tensors
    # returned by the PyTorch module are produced.
    p, n, c = x.shape
    assert p == params["p"] and c == params["c"]
    c_pad, k_pad, k = params["c_pad"], params["k_pad"], params["k"]
    w_p = params["w"]
    w_bytes = jnp.dtype(w_p.dtype).itemsize

    # Lane-densify the channel axis of x (padded channels stay exactly 0 through
    # BN/normalize because gamma/beta pads are 0, so slicing back is exact).
    x_p = jnp.pad(x.astype(jnp.float32), ((0, 0), (0, 0), (0, c_pad - c)))

    _, scoped_budget = _vmem_caps()
    p_blk, tk = _pick_tiles(p, n, c_pad, k_pad, scoped_budget, w_bytes)
    grid = (p // p_blk, k_pad // tk)

    step_bytes = _step_bytes(p_blk, n, c_pad, tk, w_bytes)
    vmem_limit = int(min(scoped_budget, max(4 << 20, step_bytes + (2 << 20))))

    cost = pl.CostEstimate(
        flops=int(2 * p * n * c_pad * k_pad + 10 * p * n * c_pad),
        transcendentals=int(p * n + p * c_pad),
        bytes_accessed=int(4 * p * n * c_pad * 2          # x in + feature out
                           + 4 * 2 * p * c_pad            # gamma + beta
                           + w_bytes * p * c_pad * k_pad  # fc_bin (bf16)
                           + 4 * p * n * k_pad),          # logits out
    )

    kernel = _make_kernel(eps_bn, eps_norm)

    feature_p, logits_p = pl.pallas_call(
        kernel,
        out_shape=(
            jax.ShapeDtypeStruct((p, n, c_pad), jnp.float32),
            jax.ShapeDtypeStruct((p, n, k_pad), jnp.float32),
        ),
        grid_spec=pltpu.PrefetchScalarGridSpec(
            num_scalar_prefetch=0,
            grid=grid,
            in_specs=[
                pl.BlockSpec((p_blk, n, c_pad), lambda i, j: (i, 0, 0)),
                pl.BlockSpec((p_blk, 1, c_pad), lambda i, j: (i, 0, 0)),
                pl.BlockSpec((p_blk, 1, c_pad), lambda i, j: (i, 0, 0)),
                pl.BlockSpec((p_blk, c_pad, tk), lambda i, j: (i, 0, j)),
            ],
            out_specs=[
                # feature block index independent of the k axis -> written once
                # per part block (accumulator-style residency across k tiles).
                pl.BlockSpec((p_blk, n, c_pad), lambda i, j: (i, 0, 0)),
                pl.BlockSpec((p_blk, n, tk), lambda i, j: (i, 0, j)),
            ],
            scratch_shapes=[pltpu.VMEM((p_blk, n, c_pad), jnp.bfloat16)],
        ),
        compiler_params=pltpu.CompilerParams(
            dimension_semantics=("parallel", "arbitrary"),
            vmem_limit_bytes=vmem_limit,
        ),
        cost_estimate=cost,
    )(x_p, params["gamma"], params["beta"], w_p)

    # Slice back to the true channel / class widths.
    return feature_p[:, :, :c], logits_p[:, :, :k]


def separate_bn_necks(x, gamma, beta, fc_bin, *, eps_bn=1e-5, eps_norm=1e-12):
    """One-shot convenience wrapper (prepares params every call).  For repeated
    use, call prepare_separate_bn_necks_params once and reuse the result."""
    params = prepare_separate_bn_necks_params(gamma, beta, fc_bin, eps_norm=eps_norm)
    return separate_bn_necks_apply(x, params, eps_bn=eps_bn, eps_norm=eps_norm)


def separate_bn_necks_ref(x, gamma, beta, fc_bin, eps_bn=1e-5, eps_norm=1e-12):
    """Pure-JAX f32 reference mirroring the PyTorch forward (parallel_BN1d, norm)."""
    p, n, c = x.shape
    xt = jnp.transpose(x, (1, 0, 2)).reshape(n, p * c)
    mean = jnp.mean(xt, axis=0, keepdims=True)
    var = jnp.mean(jnp.square(xt - mean), axis=0, keepdims=True)
    xb = (xt - mean) * lax.rsqrt(var + eps_bn) * gamma + beta
    xb = jnp.transpose(xb.reshape(n, p, c), (1, 0, 2))
    f_norm = jnp.sqrt(jnp.sum(xb * xb, axis=-1, keepdims=True))
    feature = xb / jnp.maximum(f_norm, eps_norm)
    w_norm = jnp.sqrt(jnp.sum(fc_bin * fc_bin, axis=1, keepdims=True))
    w_n = fc_bin / jnp.maximum(w_norm, eps_norm)
    logits = jnp.einsum("pnc,pck->pnk", feature, w_n)
    return feature, logits, w_n


if __name__ == "__main__":
    def run_case(parts_num, batch, in_channels, class_num, key):
        kx, kw, kg, kb = jax.random.split(key, 4)
        x = jax.random.normal(kx, (parts_num, batch, in_channels), jnp.float32)
        # fc_bin ~ xavier_uniform over (parts_num, in_channels, class_num).
        bound = math.sqrt(6.0 / (in_channels + class_num))
        fc_bin = jax.random.uniform(kw, (parts_num, in_channels, class_num),
                                    jnp.float32, minval=-bound, maxval=bound)
        # BatchNorm1d affine params (perturbed from the 1/0 init so they matter).
        gamma = 1.0 + 0.1 * jax.random.normal(kg, (parts_num * in_channels,), jnp.float32)
        beta = 0.1 * jax.random.normal(kb, (parts_num * in_channels,), jnp.float32)

        params = prepare_separate_bn_necks_params(gamma, beta, fc_bin)
        feature, logits = separate_bn_necks_apply(x, params)
        feature, logits = jax.block_until_ready((feature, logits))

        feat_ref, logit_ref, w_n_ref = separate_bn_necks_ref(x, gamma, beta, fc_bin)
        assert feature.shape == (parts_num, batch, in_channels)
        assert logits.shape == (parts_num, batch, class_num)
        # feature path is pure f32 -> tight tolerance vs the f32 reference.
        assert jnp.allclose(feature, feat_ref, atol=1e-5, rtol=1e-5), \
            float(jnp.max(jnp.abs(feature - feat_ref)))
        # logits use bf16 MXU operands (f32 accumulate) -> loose vs f32 reference.
        assert jnp.allclose(logits, logit_ref, atol=2e-2, rtol=2e-2), \
            float(jnp.max(jnp.abs(logits - logit_ref)))
        # matched-precision structural check (bf16 operands, f32 accumulate).
        logit_mp = jnp.einsum("pnc,pck->pnk",
                              feat_ref.astype(jnp.bfloat16),
                              w_n_ref.astype(jnp.bfloat16),
                              preferred_element_type=jnp.float32)
        assert jnp.allclose(logits, logit_mp, atol=2e-3, rtol=2e-3), \
            float(jnp.max(jnp.abs(logits - logit_mp)))

    key = jax.random.PRNGKey(0)
    k1, k2 = jax.random.split(key)
    # SeparateBNNecks(parts_num=16, in_channels=64, class_num=100), batch n=8:
    # grid (2, 1) -> two part blocks share the parallel axis (v7x megacore).
    run_case(16, 8, 64, 100, k1)
    # class_num=300 -> k_pad=384, three class tiles: exercises the k-tiled
    # pipeline (fc_bin DMA overlapped with the MXU) and the pl.when residency.
    run_case(4, 8, 64, 300, k2)

    print("KERNEL_OK")
</pallas_src>

<mosaic_0001>
module attributes {stable_mosaic.version = 11 : i64} {
  func.func @kernel(%arg0: i32, %arg1: i32, %arg2: memref<8x8x128xf32, #tpu.memory_space<vmem>>, %arg3: memref<8x1x128xf32, #tpu.memory_space<vmem>>, %arg4: memref<8x1x128xf32, #tpu.memory_space<vmem>>, %arg5: memref<8x128x128xbf16, #tpu.memory_space<vmem>>, %arg6: memref<8x8x128xf32, #tpu.memory_space<vmem>>, %arg7: memref<8x8x128xf32, #tpu.memory_space<vmem>>, %arg8: memref<8x8x128xbf16, #tpu.memory_space<vmem>>) attributes {dimension_semantics = [#tpu.dimension_semantics<parallel>, #tpu.dimension_semantics<arbitrary>], iteration_bounds = array<i64: 2, 1>, scalar_prefetch = 0 : i64, scratch_operands = 1 : i64, tpu.core_type = #tpu.core_type<tc>, window_params = [{transform_indices = @transform_0, window_bounds = array<i64: 8, 8, 128>}, {transform_indices = @transform_1, window_bounds = array<i64: 8, 1, 128>}, {transform_indices = @transform_2, window_bounds = array<i64: 8, 1, 128>}, {transform_indices = @transform_3, window_bounds = array<i64: 8, 128, 128>}, {transform_indices = @transform_4, window_bounds = array<i64: 8, 8, 128>}, {transform_indices = @transform_5, window_bounds = array<i64: 8, 8, 128>}]} {
    %c0_i32 = arith.constant 0 : i32
    %0 = arith.cmpi eq, %arg1, %c0_i32 : i32
    %1 = arith.extui %0 : i1 to i32
    %c0_i32_0 = arith.constant 0 : i32
    %2 = arith.cmpi ne, %1, %c0_i32_0 : i32
    scf.if %2 {
      %c0_9 = arith.constant 0 : index
      %c0_10 = arith.constant 0 : index
      %c0_11 = arith.constant 0 : index
      %7 = vector.load %arg2[%c0_9, %c0_10, %c0_11] : memref<8x8x128xf32, #tpu.memory_space<vmem>>, vector<8x8x128xf32>
      %cst_12 = arith.constant dense<0.000000e+00> : vector<8x128xf32>
      %8 = vector.multi_reduction <add>, %7, %cst_12 [1] : vector<8x8x128xf32> to vector<8x128xf32>
      %9 = vector.shape_cast %8 : vector<8x128xf32> to vector<8x1x128xf32>
      %cst_13 = arith.constant 8.000000e+00 : f32
      %10 = vector.broadcast %cst_13 : f32 to vector<8x1x128xf32>
      %11 = arith.divf %9, %10 : vector<8x1x128xf32>
      %12 = vector.broadcast %11 : vector<8x1x128xf32> to vector<8x8x128xf32>
      %13 = arith.subf %7, %12 : vector<8x8x128xf32>
      %14 = arith.mulf %13, %13 : vector<8x8x128xf32>
      %cst_14 = arith.constant dense<0.000000e+00> : vector<8x128xf32>
      %15 = vector.multi_reduction <add>, %14, %cst_14 [1] : vector<8x8x128xf32> to vector<8x128xf32>
      %16 = vector.shape_cast %15 : vector<8x128xf32> to vector<8x1x128xf32>
      %cst_15 = arith.constant 8.000000e+00 : f32
      %17 = vector.broadcast %cst_15 : f32 to vector<8x1x128xf32>
      %18 = arith.divf %16, %17 : vector<8x1x128xf32>
      %19 = vector.broadcast %11 : vector<8x1x128xf32> to vector<8x8x128xf32>
      %20 = arith.subf %7, %19 : vector<8x8x128xf32>
      %cst_16 = arith.constant 9.99999974E-6 : f32
      %21 = vector.broadcast %cst_16 : f32 to vector<8x1x128xf32>
      %22 = arith.addf %18, %21 : vector<8x1x128xf32>
      %23 = math.rsqrt %22 : vector<8x1x128xf32>
      %24 = vector.broadcast %23 : vector<8x1x128xf32> to vector<8x8x128xf32>
      %25 = arith.mulf %20, %24 : vector<8x8x128xf32>
      %c0_17 = arith.constant 0 : index
      %c0_18 = arith.constant 0 : index
      %c0_19 = arith.constant 0 : index
      %26 = vector.load %arg3[%c0_17, %c0_18, %c0_19] : memref<8x1x128xf32, #tpu.memory_space<vmem>>, vector<8x1x128xf32>
      %27 = vector.broadcast %26 : vector<8x1x128xf32> to vector<8x8x128xf32>
      %28 = arith.mulf %25, %27 : vector<8x8x128xf32>
      %c0_20 = arith.constant 0 : index
      %c0_21 = arith.constant 0 : index
      %c0_22 = arith.constant 0 : index
      %29 = vector.load %arg4[%c0_20, %c0_21, %c0_22] : memref<8x1x128xf32, #tpu.memory_space<vmem>>, vector<8x1x128xf32>
      %30 = vector.broadcast %29 : vector<8x1x128xf32> to vector<8x8x128xf32>
      %31 = arith.addf %28, %30 : vector<8x8x128xf32>
      %32 = arith.mulf %31, %31 : vector<8x8x128xf32>
      %cst_23 = arith.constant dense<0.000000e+00> : vector<8x8xf32>
      %33 = vector.multi_reduction <add>, %32, %cst_23 [2] : vector<8x8x128xf32> to vector<8x8xf32>
      %34 = vector.shape_cast %33 : vector<8x8xf32> to vector<8x8x1xf32>
      %cst_24 = arith.constant 1.000000e-24 : f32
      %35 = vector.broadcast %cst_24 : f32 to vector<8x8x1xf32>
      %36 = arith.maximumf %34, %35 : vector<8x8x1xf32>
      %37 = math.rsqrt %36 : vector<8x8x1xf32>
      %38 = vector.broadcast %37 : vector<8x8x1xf32> to vector<8x8x128xf32>
      %39 = arith.mulf %31, %38 : vector<8x8x128xf32>
      %c0_25 = arith.constant 0 : index
      %c0_26 = arith.constant 0 : index
      %c0_27 = arith.constant 0 : index
      %40 = vector.load %arg6[%c0_25, %c0_26, %c0_27] : memref<8x8x128xf32, #tpu.memory_space<vmem>>, vector<8x8x128xf32>
      tpu.vector_store %arg6[%c0_25, %c0_26, %c0_27], %39 {strides = array<i32>} : memref<8x8x128xf32, #tpu.memory_space<vmem>>, vector<8x8x128xf32>,
      %41 = arith.truncf %39 : vector<8x8x128xf32> to vector<8x8x128xbf16>
      %c0_28 = arith.constant 0 : index
      %c0_29 = arith.constant 0 : index
      %c0_30 = arith.constant 0 : index
      %42 = vector.load %arg8[%c0_28, %c0_29, %c0_30] : memref<8x8x128xbf16, #tpu.memory_space<vmem>>, vector<8x8x128xbf16>
      tpu.vector_store %arg8[%c0_28, %c0_29, %c0_30], %41 {strides = array<i32>} : memref<8x8x128xbf16, #tpu.memory_space<vmem>>, vector<8x8x128xbf16>,
    } else {
    }
    %c0 = arith.constant 0 : index
    %c0_1 = arith.constant 0 : index
    %c0_2 = arith.constant 0 : index
    %3 = vector.load %arg8[%c0, %c0_1, %c0_2] : memref<8x8x128xbf16, #tpu.memory_space<vmem>>, vector<8x8x128xbf16>
    %c0_3 = arith.constant 0 : index
    %c0_4 = arith.constant 0 : index
    %c0_5 = arith.constant 0 : index
    %4 = vector.load %arg5[%c0_3, %c0_4, %c0_5] : memref<8x128x128xbf16, #tpu.memory_space<vmem>>, vector<8x128x128xbf16>
    "tpu.trace_start"() <{level = 10 : i32, message = "pnc,pck->pnk"}> : () -> ()
    %cst = arith.constant dense<0.000000e+00> : vector<8x8x128xf32>
    %5 = tpu.matmul %3, %4, %cst {dimension_numbers = #tpu.dot_dimension_numbers<[2], [1], [1], [2], [0, 0, 0, 1, 1, 2], [0], [0]>} : vector<8x8x128xbf16>, vector<8x128x128xbf16>, vector<8x8x128xf32> -> vector<8x8x128xf32>
    "tpu.trace_stop"() : () -> ()
    %c0_6 = arith.constant 0 : index
    %c0_7 = arith.constant 0 : index
    %c0_8 = arith.constant 0 : index
    %6 = vector.load %arg7[%c0_6, %c0_7, %c0_8] : memref<8x8x128xf32, #tpu.memory_space<vmem>>, vector<8x8x128xf32>
    tpu.vector_store %arg7[%c0_6, %c0_7, %c0_8], %5 {strides = array<i32>} : memref<8x8x128xf32, #tpu.memory_space<vmem>>, vector<8x8x128xf32>,
    return
  }
  func.func @transform_0(%arg0: i32, %arg1: i32) -> (i32, i32, i32) {
    %c0_i32 = arith.constant 0 : i32
    %c0_i32_0 = arith.constant 0 : i32
    %c0_i32_1 = arith.constant 0 : i32
    return %arg0, %c0_i32, %c0_i32_0 : i32, i32, i32
  }
  func.func @transform_1(%arg0: i32, %arg1: i32) -> (i32, i32, i32) {
    %c0_i32 = arith.constant 0 : i32
    %c0_i32_0 = arith.constant 0 : i32
    %c0_i32_1 = arith.constant 0 : i32
    return %arg0, %c0_i32, %c0_i32_0 : i32, i32, i32
  }
  func.func @transform_2(%arg0: i32, %arg1: i32) -> (i32, i32, i32) {
    %c0_i32 = arith.constant 0 : i32
    %c0_i32_0 = arith.constant 0 : i32
    %c0_i32_1 = arith.constant 0 : i32
    return %arg0, %c0_i32, %c0_i32_0 : i32, i32, i32
  }
  func.func @transform_3(%arg0: i32, %arg1: i32) -> (i32, i32, i32) {
    %c0_i32 = arith.constant 0 : i32
    %c0_i32_0 = arith.constant 0 : i32
    return %arg0, %c0_i32, %arg1 : i32, i32, i32
  }
  func.func @transform_4(%arg0: i32, %arg1: i32) -> (i32, i32, i32) {
    %c0_i32 = arith.constant 0 : i32
    %c0_i32_0 = arith.constant 0 : i32
    %c0_i32_1 = arith.constant 0 : i32
    return %arg0, %c0_i32, %c0_i32_0 : i32, i32, i32
  }
  func.func @transform_5(%arg0: i32, %arg1: i32) -> (i32, i32, i32) {
    %c0_i32 = arith.constant 0 : i32
    %c0_i32_0 = arith.constant 0 : i32
    return %arg0, %c0_i32, %arg1 : i32, i32, i32
  }
}

</mosaic_0001>

<llo_original>
// kernel: tpu_custom_call.1
$region0: #{tpu_custom_call.1}
  #allocation0 [shape = 'u32[]', space=smem, size = 0x4, offset = 0x4, fixed_abs, tag = 'smem constant byte address 0x4 - core index']
  #allocation1 [shape = 'u32[144,128]{1,0:T(1,128)}', space=vmem, size = 0x12000, scoped, tag = 'internal scratch']
  #allocation2 [shape = 'bf16[8,8,128]{2,1,0:T(8,128)(2,1)}', space=vmem, size = 0x4000, scoped, tag = 'scratch operand']
  %s0 = inlined_call_operand.hbm [shape: f32[16,8,128], index: 0, kind: input, shape index: {}]
  %s1 = inlined_call_operand.hbm [shape: f32[16,1,128], index: 1, kind: input, shape index: {}]
  %s2 = inlined_call_operand.hbm [shape: f32[16,1,128], index: 2, kind: input, shape index: {}]
  %s3 = inlined_call_operand.hbm [shape: bf16[16,128,128], index: 3, kind: input, shape index: {}]
  %s4 = inlined_call_operand.hbm [shape: f32[16,8,128], index: 4, kind: output, shape index: {0}]
  %s5 = inlined_call_operand.hbm [shape: f32[16,8,128], index: 5, kind: output, shape index: {1}]
  %6 = xla_tuple %s4, %s5
  %s7 = sld [smem:[#allocation0]]
  $region77: #{tpu_custom_call.1} parent=0
    _
  %s9 = ssub.s32 1, %s7
  %s10 = scalar_select 0, %s9, %s7
  $region1: #{tpu_custom_call.1} parent=0
    #allocation3 [shape = 'u8[65536]{0}', space=vmem, size = 0x10000, scoped, tag = 'input window, operand 0']
    #allocation4 [shape = 's32[2]{0}', space=sflag, size = 0x8, scoped, tag = 'scoped memory for tpu_custom_call.1']
    #allocation5 [shape = 's32[2]{0}', space=sflag, size = 0x8, scoped, tag = 'scoped memory for tpu_custom_call.1']
    #allocation6 [shape = 'u8[8192]{0}', space=vmem, size = 0x2000, scoped, tag = 'input window, operand 1']
    #allocation7 [shape = 's32[2]{0}', space=sflag, size = 0x8, scoped, tag = 'scoped memory for tpu_custom_call.1']
    #allocation8 [shape = 'u8[8192]{0}', space=vmem, size = 0x2000, scoped, tag = 'input window, operand 2']
    #allocation9 [shape = 'u8[524288]{0}', space=vmem, size = 0x80000, scoped, tag = 'input window, operand 3']
    #allocation10 [shape = 's32[2]{0}', space=sflag, size = 0x8, scoped, tag = 'scoped memory for tpu_custom_call.1']
    #allocation11 [shape = 'u8[65536]{0}', space=vmem, size = 0x10000, scoped, tag = 'output window, operand 0']
    #allocation12 [shape = 'u8[65536]{0}', space=vmem, size = 0x10000, scoped, tag = 'output window, operand 1']
    #allocation13 [shape = 's32[2]{0}', space=sflag, size = 0x8, scoped, tag = 'scoped memory for tpu_custom_call.1']
    %11 = vsyncpa [#allocation4], 0
    %s12 = scalar_lea.sflag [#allocation4], 1
    %13 = vsyncpa %s12, 0
    %14 = vsyncpa [#allocation7], 0
    %s15 = scalar_lea.sflag [#allocation7], 1
    %16 = vsyncpa %s15, 0
    %17 = vsyncpa [#allocation10], 0
    %s18 = scalar_lea.sflag [#allocation10], 1
    %19 = vsyncpa %s18, 0
    %20 = vsyncpa [#allocation5], 0
    %s21 = scalar_lea.sflag [#allocation5], 1
    %22 = vsyncpa %s21, 0
    %23 = vsyncpa [#allocation13], 0
    %s24 = scalar_lea.sflag [#allocation13], 1
    %25 = vsyncpa %s24, 0
    loop: start=0, step=1, limit=4
    $region2: #{tpu_custom_call.1} parent=1 // loop_pre_header
      _
    $region3: #{tpu_custom_call.1} parent=1 // loop_header
      %s27 = sphi 0, %s31
      %p28 = scmp.ge.s32.totalorder %s27, 4
      %s34 = sphi 0, %s46
      %s35 = sphi 0, %s42
      %s36 = sphi 0, %s34
      %s37 = sphi 0, %s35
      %s38 = sphi 0, %s36
      %s39 = sphi 0, %s37
      %s49 = sphi 0, %s51
      %s52 = sphi 0, %s49
      %s53 = sphi 0, %s52
      %s69 = sphi 0, %s53
      %s75 = sphi 0, %s77
      %s78 = sphi 0, %s75
      %s79 = sphi 0, %s78
      %s95 = sphi 0, %s79
      %s101 = sphi 0, %s103
      %s104 = sphi 0, %s101
      %s105 = sphi 0, %s104
      %s121 = sphi 0, %s105
      %s129 = sphi 0, %s131
      %s132 = sphi 0, %s129
      %s133 = sphi 0, %s132
      %s149 = sphi 0, %s133
      %s155 = sphi 0, %s157
      %s158 = sphi 0, %s155
      %s159 = sphi 0, %s158
      %s175 = sphi 0, %s159
      %s183 = sphi 0, %s185
      %s186 = sphi 0, %s183
      %s187 = sphi 0, %s186
      %s203 = sphi 0, %s187
    $region4: #{tpu_custom_call.1} parent=1 // loop_header_branch
      %30 = sbr.rel (%p28) target = $region8
    $region5: #{tpu_custom_call.1} parent=1 // loop_body
      %s32 = ssub.s32 %s27, 1
      %s33 = ssub.s32 %s27, 2
      %s40 = sadd.s32 1, %s35
      %p41 = scmp.ge.s32.totalorder %s40, 1
      %s42 = scalar_select %p41, 0, %s40
      %s43 = sadd.s32 1, %s34
      %s44 = scalar_select %p41, %s43, %s34
      %p45 = scmp.ge.s32.totalorder %s44, 2
      %s46 = scalar_select %p45, 0, %s44
      %s47 = ssub.s32 %s34, %s46
      %p48 = scmp.eq.s32.totalorder %s47, 0
      %s50 = sadd.s32 %s49, 1
      %s51 = scalar_select %p48, %s49, %s50
      %p54 = pneg %p48
      %p55 = scmp.eq.s32.totalorder %s27, 1
      %p56 = por %p54, %p55
      %p57 = scmp.ne.s32.totalorder %s49, %s52
      %p58 = scmp.eq.s32.totalorder %s27, 0
      %p59 = por %p57, %p58
      %p60 = scmp.ne.s32.totalorder %s49, %s52
      %p61 = scmp.eq.s32.totalorder %s32, 1
      %p62 = por %p60, %p61
      %p63 = scmp.ne.s32.totalorder %s52, %s53
      %p64 = scmp.eq.s32.totalorder %s32, 0
      %p65 = por %p63, %p64
      %p66 = scmp.ne.s32.totalorder %s52, %s53
      %p67 = scmp.eq.s32.totalorder %s33, 1
      %p68 = por %p66, %p67
      %p70 = scmp.ne.s32.totalorder %s53, %s69
      %p71 = scmp.eq.s32.totalorder %s33, 0
      %p72 = por %p70, %p71
      %s73 = ssub.s32 %s34, %s46
      %p74 = scmp.eq.s32.totalorder %s73, 0
      %s76 = sadd.s32 %s75, 1
      %s77 = scalar_select %p74, %s75, %s76
      %p80 = pneg %p74
      %p81 = scmp.eq.s32.totalorder %s27, 1
      %p82 = por %p80, %p81
      %p83 = scmp.ne.s32.totalorder %s75, %s78
      %p84 = scmp.eq.s32.totalorder %s27, 0
      %p85 = por %p83, %p84
      %p86 = scmp.ne.s32.totalorder %s75, %s78
      %p87 = scmp.eq.s32.totalorder %s32, 1
      %p88 = por %p86, %p87
      %p89 = scmp.ne.s32.totalorder %s78, %s79
      %p90 = scmp.eq.s32.totalorder %s32, 0
      %p91 = por %p89, %p90
      %p92 = scmp.ne.s32.totalorder %s78, %s79
      %p93 = scmp.eq.s32.totalorder %s33, 1
      %p94 = por %p92, %p93
      %p96 = scmp.ne.s32.totalorder %s79, %s95
      %p97 = scmp.eq.s32.totalorder %s33, 0
      %p98 = por %p96, %p97
      %s99 = ssub.s32 %s34, %s46
      %p100 = scmp.eq.s32.totalorder %s99, 0
      %s102 = sadd.s32 %s101, 1
      %s103 = scalar_select %p100, %s101, %s102
      %p106 = pneg %p100
      %p107 = scmp.eq.s32.totalorder %s27, 1
      %p108 = por %p106, %p107
      %p109 = scmp.ne.s32.totalorder %s101, %s104
      %p110 = scmp.eq.s32.totalorder %s27, 0
      %p111 = por %p109, %p110
      %p112 = scmp.ne.s32.totalorder %s101, %s104
      %p113 = scmp.eq.s32.totalorder %s32, 1
      %p114 = por %p112, %p113
      %p115 = scmp.ne.s32.totalorder %s104, %s105
      %p116 = scmp.eq.s32.totalorder %s32, 0
      %p117 = por %p115, %p116
      %p118 = scmp.ne.s32.totalorder %s104, %s105
      %p119 = scmp.eq.s32.totalorder %s33, 1
      %p120 = por %p118, %p119
      %p122 = scmp.ne.s32.totalorder %s105, %s121
      %p123 = scmp.eq.s32.totalorder %s33, 0
      %p124 = por %p122, %p123
      %s125 = ssub.s32 %s34, %s46
      %s126 = ssub.s32 %s35, %s42
      %s127 = sor.u32 %s125, %s126
      %p128 = scmp.eq.s32.totalorder %s127, 0
      %s130 = sadd.s32 %s129, 1
      %s131 = scalar_select %p128, %s129, %s130
      %p134 = pneg %p128
      %p135 = scmp.eq.s32.totalorder %s27, 1
      %p136 = por %p134, %p135
      %p137 = scmp.ne.s32.totalorder %s129, %s132
      %p138 = scmp.eq.s32.totalorder %s27, 0
      %p139 = por %p137, %p138
      %p140 = scmp.ne.s32.totalorder %s129, %s132
      %p141 = scmp.eq.s32.totalorder %s32, 1
      %p142 = por %p140, %p141
      %p143 = scmp.ne.s32.totalorder %s132, %s133
      %p144 = scmp.eq.s32.totalorder %s32, 0
      %p145 = por %p143, %p144
      %p146 = scmp.ne.s32.totalorder %s132, %s133
      %p147 = scmp.eq.s32.totalorder %s33, 1
      %p148 = por %p146, %p147
      %p150 = scmp.ne.s32.totalorder %s133, %s149
      %p151 = scmp.eq.s32.totalorder %s33, 0
      %p152 = por %p150, %p151
      %s153 = ssub.s32 %s34, %s46
      %p154 = scmp.eq.s32.totalorder %s153, 0
      %s156 = sadd.s32 %s155, 1
      %s157 = scalar_select %p154, %s155, %s156
      %p160 = pneg %p154
      %p161 = scmp.eq.s32.totalorder %s27, 1
      %p162 = por %p160, %p161
      %p163 = scmp.ne.s32.totalorder %s155, %s158
      %p164 = scmp.eq.s32.totalorder %s27, 0
      %p165 = por %p163, %p164
      %p166 = scmp.ne.s32.totalorder %s155, %s158
      %p167 = scmp.eq.s32.totalorder %s32, 1
      %p168 = por %p166, %p167
      %p169 = scmp.ne.s32.totalorder %s158, %s159
      %p170 = scmp.eq.s32.totalorder %s32, 0
      %p171 = por %p169, %p170
      %p172 = scmp.ne.s32.totalorder %s158, %s159
      %p173 = scmp.eq.s32.totalorder %s33, 1
      %p174 = por %p172, %p173
      %p176 = scmp.ne.s32.totalorder %s159, %s175
      %p177 = scmp.eq.s32.totalorder %s33, 0
      %p178 = por %p176, %p177
      %s179 = ssub.s32 %s34, %s46
      %s180 = ssub.s32 %s35, %s42
      %s181 = sor.u32 %s179, %s180
      %p182 = scmp.eq.s32.totalorder %s181, 0
      %s184 = sadd.s32 %s183, 1
      %s185 = scalar_select %p182, %s183, %s184
      %p188 = pneg %p182
      %p189 = scmp.eq.s32.totalorder %s27, 1
      %p190 = por %p188, %p189
      %p191 = scmp.ne.s32.totalorder %s183, %s186
      %p192 = scmp.eq.s32.totalorder %s27, 0
      %p193 = por %p191, %p192
      %p194 = scmp.ne.s32.totalorder %s183, %s186
      %p195 = scmp.eq.s32.totalorder %s32, 1
      %p196 = por %p194, %p195
      %p197 = scmp.ne.s32.totalorder %s186, %s187
      %p198 = scmp.eq.s32.totalorder %s32, 0
      %p199 = por %p197, %p198
      %p200 = scmp.ne.s32.totalorder %s186, %s187
      %p201 = scmp.eq.s32.totalorder %s33, 1
      %p202 = por %p200, %p201
      %p204 = scmp.ne.s32.totalorder %s187, %s203
      %p205 = scmp.eq.s32.totalorder %s33, 0
      %p206 = por %p204, %p205
      %p207 = scmp.le.s32.totalorder 1, %s27
      %p208 = scmp.lt.s32.totalorder %s27, 3
      %p209 = pnand %p207, %p208
      %p210 = pneg %p209
      // Predicated region
      $region9: #{tpu_custom_call.1} parent=5 // pred_check
        _
      $region10: #{tpu_custom_call.1} parent=5 // pred_check_branch
        %212 = sbr.rel (%p209) target = $region12
      $region11: #{tpu_custom_call.1} parent=5 // pred_region
        %s213 = ssub.s32 %s27, 1
      $region12: #{tpu_custom_call.1} parent=5 // pred_fallthru
        _
      %p214 = scmp.lt.s32.totalorder %s27, 2
      // Predicated region
      $region13: #{tpu_custom_call.1} parent=5 // pred_check
        %p215 = pneg %p214
      $region14: #{tpu_custom_call.1} parent=5 // pred_check_branch
        %217 = sbr.rel (%p215) target = $region16
      $region15: #{tpu_custom_call.1} parent=5 // pred_region
        // Predicated region
        $region17: #{tpu_custom_call.1} parent=15 // pred_check
          %p218 = pneg %p59
        $region18: #{tpu_custom_call.1} parent=15 // pred_check_branch
          %220 = sbr.rel (%p218) target = $region20
        $region19: #{tpu_custom_call.1} parent=15 // pred_region
          %s221 = sand.u32 %s49, 1
          %s222 = scalar_lea.sflag [#allocation4], %s221
          %s223 = sand.u32 %s49, 1
          %s224 = smul.addr %s223, 64
          %s225 = scalar_lea.vmem [#allocation3], %s224
          %s226 = smul.u32 8, %s34
          %s228 = ssub.s32 1024, 1024
          %229 = vsyncadd %s222, %s228
          %s230 = smul.addr %s226, 128
          %s231 = scalar_lea.hbm %s0, %s230
          %s232 = sshll.u32 %s225, 4
          %s233 = int_to_ptr.vmem [resolvable:$true] %s232
          %238 = dma.hbm_to_vmem [thread:$0]  %s231, 1024, %s233, %s222, 128, 128, 8
        $region20: #{tpu_custom_call.1} parent=15 // pred_fallthru
          _
        // Predicated region
        $region21: #{tpu_custom_call.1} parent=15 // pred_check
          %p239 = pneg %p85
        $region22: #{tpu_custom_call.1} parent=15 // pred_check_branch
          %241 = sbr.rel (%p239) target = $region24
        $region23: #{tpu_custom_call.1} parent=15 // pred_region
          %s242 = sand.u32 %s27, 1
          %s243 = scalar_lea.sflag [#allocation7], %s242
          %s244 = sand.u32 %s75, 1
          %s245 = smul.addr %s244, 8
          %s246 = scalar_lea.vmem [#allocation6], %s245
          %s247 = smul.u32 8, %s34
          %s249 = ssub.s32 128, 128
          %250 = vsyncadd %s243, %s249
          %s251 = smul.addr %s247, 16
          %s252 = scalar_lea.hbm %s1, %s251
          %s253 = sshll.u32 %s246, 4
          %s254 = int_to_ptr.vmem [resolvable:$true] %s253
          %259 = dma.hbm_to_vmem [thread:$0]  %s252, 128, %s254, %s243, 16, 16, 1
        $region24: #{tpu_custom_call.1} parent=15 // pred_fallthru
          _
        // Predicated region
        $region25: #{tpu_custom_call.1} parent=15 // pred_check
          %p260 = pneg %p111
        $region26: #{tpu_custom_call.1} parent=15 // pred_check_branch
          %262 = sbr.rel (%p260) target = $region28
        $region27: #{tpu_custom_call.1} parent=15 // pred_region
          %s263 = sand.u32 %s27, 1
          %s264 = scalar_lea.sflag [#allocation7], %s263
          %s265 = sand.u32 %s101, 1
          %s266 = smul.addr %s265, 8
          %s267 = scalar_lea.vmem [#allocation8], %s266
          %s268 = smul.u32 8, %s34
          %s270 = ssub.s32 128, 128
          %271 = vsyncadd %s264, %s270
          %s272 = smul.addr %s268, 16
          %s273 = scalar_lea.hbm %s2, %s272
          %s274 = sshll.u32 %s267, 4
          %s275 = int_to_ptr.vmem [resolvable:$true] %s274
          %280 = dma.hbm_to_vmem [thread:$0]  %s273, 128, %s275, %s264, 16, 16, 1
        $region28: #{tpu_custom_call.1} parent=15 // pred_fallthru
          _
        // Predicated region
        $region29: #{tpu_custom_call.1} parent=15 // pred_check
          %p281 = pneg %p139
        $region30: #{tpu_custom_call.1} parent=15 // pred_check_branch
          %283 = sbr.rel (%p281) target = $region32
        $region31: #{tpu_custom_call.1} parent=15 // pred_region
          %s284 = sand.u32 %s129, 1
          %s285 = scalar_lea.sflag [#allocation10], %s284
          %s286 = sand.u32 %s129, 1
          %s287 = smul.addr %s286, 512
          %s288 = scalar_lea.vmem [#allocation9], %s287
          %s289 = smul.u32 8, %s34
          %s291 = ssub.s32 8192, 8192
          %292 = vsyncadd %s285, %s291
          %s293 = smul.addr %s289, 16
          %s294 = sadd.s32 %s35, %s293
          %s295 = smul.addr %s294, 64
          %s296 = scalar_lea.hbm %s3, %s295
          %s297 = sshll.u32 %s288, 4
          %s298 = int_to_ptr.vmem [resolvable:$true] %s297
          %303 = dma.hbm_to_vmem [thread:$0]  %s296, 8192, %s298, %s285, 64, 64, 4
        $region32: #{tpu_custom_call.1} parent=15 // pred_fallthru
          _
      $region16: #{tpu_custom_call.1} parent=5 // pred_fallthru
        _
      %p304 = scmp.le.s32.totalorder 1, %s27
      %p305 = scmp.lt.s32.totalorder %s27, 3
      %p306 = pnand %p304, %p305
      %p307 = pneg %p306
      // Predicated region
      $region33: #{tpu_custom_call.1} parent=5 // pred_check
        _
      $region34: #{tpu_custom_call.1} parent=5 // pred_check_branch
        %309 = sbr.rel (%p306) target = $region36
      $region35: #{tpu_custom_call.1} parent=5 // pred_region
        %s310 = ssub.s32 %s27, 1
        %s311 = sand.u32 %s52, 1
        %s312 = scalar_lea.sflag [#allocation4], %s311
        %s313 = sand.u32 %s52, 1
        %s314 = smul.addr %s313, 64
        %s315 = scalar_lea.vmem [#allocation3], %s314
        // Predicated region
        $region37: #{tpu_custom_call.1} parent=35 // pred_check
          %p316 = pneg %p65
        $region38: #{tpu_custom_call.1} parent=35 // pred_check_branch
          %318 = sbr.rel (%p316) target = $region40
        $region39: #{tpu_custom_call.1} parent=35 // pred_region
          %319 = dma.done %s312, 1024
        $region40: #{tpu_custom_call.1} parent=35 // pred_fallthru
          _
        %s320 = sand.u32 %s32, 1
        %s321 = scalar_lea.sflag [#allocation7], %s320
        %s322 = sand.u32 %s78, 1
        %s323 = smul.addr %s322, 8
        %s324 = scalar_lea.vmem [#allocation6], %s323
        // Predicated region
        $region41: #{tpu_custom_call.1} parent=35 // pred_check
          %p325 = pneg %p91
        $region42: #{tpu_custom_call.1} parent=35 // pred_check_branch
          %327 = sbr.rel (%p325) target = $region44
        $region43: #{tpu_custom_call.1} parent=35 // pred_region
          %328 = dma.done %s321, 128
        $region44: #{tpu_custom_call.1} parent=35 // pred_fallthru
          _
        %s329 = sand.u32 %s32, 1
        %s330 = scalar_lea.sflag [#allocation7], %s329
        %s331 = sand.u32 %s104, 1
        %s332 = smul.addr %s331, 8
        %s333 = scalar_lea.vmem [#allocation8], %s332
        // Predicated region
        $region45: #{tpu_custom_call.1} parent=35 // pred_check
          %p334 = pneg %p117
        $region46: #{tpu_custom_call.1} parent=35 // pred_check_branch
          %336 = sbr.rel (%p334) target = $region48
        $region47: #{tpu_custom_call.1} parent=35 // pred_region
          %337 = dma.done %s330, 128
        $region48: #{tpu_custom_call.1} parent=35 // pred_fallthru
          _
        %s338 = sand.u32 %s132, 1
        %s339 = scalar_lea.sflag [#allocation10], %s338
        %s340 = sand.u32 %s132, 1
        %s341 = smul.addr %s340, 512
        %s342 = scalar_lea.vmem [#allocation9], %s341
        // Predicated region
        $region49: #{tpu_custom_call.1} parent=35 // pred_check
          %p343 = pneg %p145
        $region50: #{tpu_custom_call.1} parent=35 // pred_check_branch
          %345 = sbr.rel (%p343) target = $region52
        $region51: #{tpu_custom_call.1} parent=35 // pred_region
          %346 = dma.done %s339, 8192
        $region52: #{tpu_custom_call.1} parent=35 // pred_fallthru
          _
        %s347 = sand.u32 %s52, 1
        %s348 = scalar_lea.sflag [#allocation4], %s347
        %s349 = sand.u32 %s52, 1
        %s350 = smul.addr %s349, 64
        %s351 = scalar_lea.vmem [#allocation3], %s350
        %p352 = pneg %p65
        %p353 = pneg %p62
        %s354 = sand.u32 %s32, 1
        %s355 = scalar_lea.sflag [#allocation7], %s354
        %s356 = sand.u32 %s78, 1
        %s357 = smul.addr %s356, 8
        %s358 = scalar_lea.vmem [#allocation6], %s357
        %p359 = pneg %p91
        %p360 = pneg %p88
        %s361 = sand.u32 %s32, 1
        %s362 = scalar_lea.sflag [#allocation7], %s361
        %s363 = sand.u32 %s104, 1
        %s364 = smul.addr %s363, 8
        %s365 = scalar_lea.vmem [#allocation8], %s364
        %p366 = pneg %p117
        %p367 = pneg %p114
        %s368 = sand.u32 %s132, 1
        %s369 = scalar_lea.sflag [#allocation10], %s368
        %s370 = sand.u32 %s132, 1
        %s371 = smul.addr %s370, 512
        %s372 = scalar_lea.vmem [#allocation9], %s371
        %p373 = pneg %p145
        %p374 = pneg %p142
        %p375 = pneg %p171
        %p376 = pneg %p168
        %s377 = sand.u32 %s158, 1
        %s378 = scalar_lea.sflag [#allocation5], %s377
        %s379 = sand.u32 %s158, 1
        %s380 = smul.addr %s379, 64
        %s381 = scalar_lea.vmem [#allocation11], %s380
        %p382 = pneg %p199
        %p383 = pneg %p196
        %s384 = sand.u32 %s186, 1
        %s385 = scalar_lea.sflag [#allocation13], %s384
        %s386 = sand.u32 %s186, 1
        %s387 = smul.addr %s386, 64
        %s388 = scalar_lea.vmem [#allocation12], %s387
        %s389 = smul.u32 8, %s36
        %s390 = smul.u32 8, %s36
        %s391 = smul.u32 8, %s36
        %s392 = smul.u32 8, %s36
        %s393 = smul.u32 8, %s36
        %s394 = smul.u32 8, %s36
        %p396 = scmp.eq.s32.totalorder %s37, 0
        // Predicated region
        $region53: #{tpu_custom_call.1} parent=35 // pred_check
          %p397 = pneg %p396
        $region54: #{tpu_custom_call.1} parent=35 // pred_check_branch
          %399 = sbr.rel (%p397) target = $region56
        $region55: #{tpu_custom_call.1} parent=35 // pred_region
          %v400 = vld [vmem:[%s315] sm:$0xff]
          %v401 = vld [vmem:[%s315 + $0x8] sm:$0xff]
          %v402 = vld [vmem:[%s315 + $0x10] sm:$0xff]
          %v403 = vld [vmem:[%s315 + $0x18] sm:$0xff]
          %v404 = vld [vmem:[%s315 + $0x20] sm:$0xff]
          %v405 = vld [vmem:[%s315 + $0x28] sm:$0xff]
          %v406 = vld [vmem:[%s315 + $0x30] sm:$0xff]
          %v407 = vld [vmem:[%s315 + $0x38] sm:$0xff]
          %v408 = vrot.slane %v400, 4
          %v409 = vadd.f32 %v400, %v408
          %v410 = vrot.slane %v409, 2
          %v411 = vadd.f32 %v409, %v410
          %v412 = vrot.slane %v411, 1
          %v413 = vadd.f32 %v411, %v412
          %v414 = vrot.slane %v401, 4
          %v415 = vadd.f32 %v401, %v414
          %v416 = vrot.slane %v415, 2
          %v417 = vadd.f32 %v415, %v416
          %v418 = vrot.slane %v417, 1
          %v419 = vadd.f32 %v417, %v418
          %v420 = vrot.slane %v402, 4
          %v421 = vadd.f32 %v402, %v420
          %v422 = vrot.slane %v421, 2
          %v423 = vadd.f32 %v421, %v422
          %v424 = vrot.slane %v423, 1
          %v425 = vadd.f32 %v423, %v424
          %v426 = vrot.slane %v403, 4
          %v427 = vadd.f32 %v403, %v426
          %v428 = vrot.slane %v427, 2
          %v429 = vadd.f32 %v427, %v428
          %v430 = vrot.slane %v429, 1
          %v431 = vadd.f32 %v429, %v430
          %v432 = vrot.slane %v404, 4
          %v433 = vadd.f32 %v404, %v432
          %v434 = vrot.slane %v433, 2
          %v435 = vadd.f32 %v433, %v434
          %v436 = vrot.slane %v435, 1
          %v437 = vadd.f32 %v435, %v436
          %v438 = vrot.slane %v405, 4
          %v439 = vadd.f32 %v405, %v438
          %v440 = vrot.slane %v439, 2
          %v441 = vadd.f32 %v439, %v440
          %v442 = vrot.slane %v441, 1
          %v443 = vadd.f32 %v441, %v442
          %v444 = vrot.slane %v406, 4
          %v445 = vadd.f32 %v406, %v444
          %v446 = vrot.slane %v445, 2
          %v447 = vadd.f32 %v445, %v446
          %v448 = vrot.slane %v447, 1
          %v449 = vadd.f32 %v447, %v448
          %v450 = vrot.slane %v407, 4
          %v451 = vadd.f32 %v407, %v450
          %v452 = vrot.slane %v451, 2
          %v453 = vadd.f32 %v451, %v452
          %v454 = vrot.slane %v453, 1
          %v455 = vadd.f32 %v453, %v454
          %v456 = vrcp.pop 8.0
          %v457 = vmul.f32 %v413, %v456
          %v458 = vmul.f32 %v419, %v456
          %v459 = vmul.f32 %v425, %v456
          %v460 = vmul.f32 %v431, %v456
          %v461 = vmul.f32 %v437, %v456
          %v462 = vmul.f32 %v443, %v456
          %v463 = vmul.f32 %v449, %v456
          %v464 = vmul.f32 %v455, %v456
          %v465 = vsub.f32 %v400, %v457
          %v466 = vsub.f32 %v401, %v458
          %v467 = vsub.f32 %v402, %v459
          %v468 = vsub.f32 %v403, %v460
          %v469 = vsub.f32 %v404, %v461
          %v470 = vsub.f32 %v405, %v462
          %v471 = vsub.f32 %v406, %v463
          %v472 = vsub.f32 %v407, %v464
          %v473 = vmul.f32 %v465, %v465
          %v474 = vmul.f32 %v466, %v466
          %v475 = vmul.f32 %v467, %v467
          %v476 = vmul.f32 %v468, %v468
          %v477 = vmul.f32 %v469, %v469
          %v478 = vmul.f32 %v470, %v470
          %v479 = vmul.f32 %v471, %v471
          %v480 = vmul.f32 %v472, %v472
          %v481 = vrot.slane %v473, 4
          %v482 = vadd.f32 %v473, %v481
          %v483 = vrot.slane %v482, 2
          %v484 = vadd.f32 %v482, %v483
          %v485 = vrot.slane %v484, 1
          %v486 = vadd.f32 %v484, %v485
          %v487 = vrot.slane %v474, 4
          %v488 = vadd.f32 %v474, %v487
          %v489 = vrot.slane %v488, 2
          %v490 = vadd.f32 %v488, %v489
          %v491 = vrot.slane %v490, 1
          %v492 = vadd.f32 %v490, %v491
          %v493 = vrot.slane %v475, 4
          %v494 = vadd.f32 %v475, %v493
          %v495 = vrot.slane %v494, 2
          %v496 = vadd.f32 %v494, %v495
          %v497 = vrot.slane %v496, 1
          %v498 = vadd.f32 %v496, %v497
          %v499 = vrot.slane %v476, 4
          %v500 = vadd.f32 %v476, %v499
          %v501 = vrot.slane %v500, 2
          %v502 = vadd.f32 %v500, %v501
          %v503 = vrot.slane %v502, 1
          %v504 = vadd.f32 %v502, %v503
          %v505 = vrot.slane %v477, 4
          %v506 = vadd.f32 %v477, %v505
          %v507 = vrot.slane %v506, 2
          %v508 = vadd.f32 %v506, %v507
          %v509 = vrot.slane %v508, 1
          %v510 = vadd.f32 %v508, %v509
          %v511 = vrot.slane %v478, 4
          %v512 = vadd.f32 %v478, %v511
          %v513 = vrot.slane %v512, 2
          %v514 = vadd.f32 %v512, %v513
          %v515 = vrot.slane %v514, 1
          %v516 = vadd.f32 %v514, %v515
          %v517 = vrot.slane %v479, 4
          %v518 = vadd.f32 %v479, %v517
          %v519 = vrot.slane %v518, 2
          %v520 = vadd.f32 %v518, %v519
          %v521 = vrot.slane %v520, 1
          %v522 = vadd.f32 %v520, %v521
          %v523 = vrot.slane %v480, 4
          %v524 = vadd.f32 %v480, %v523
          %v525 = vrot.slane %v524, 2
          %v526 = vadd.f32 %v524, %v525
          %v527 = vrot.slane %v526, 1
          %v528 = vadd.f32 %v526, %v527
          %v529 = vmul.f32 %v486, %v456
          %v530 = vmul.f32 %v492, %v456
          %v531 = vmul.f32 %v498, %v456
          %v532 = vmul.f32 %v504, %v456
          %v533 = vmul.f32 %v510, %v456
          %v534 = vmul.f32 %v516, %v456
          %v535 = vmul.f32 %v522, %v456
          %v536 = vmul.f32 %v528, %v456
          %v537 = vadd.f32 %v529, 1e-05
          %v538 = vadd.f32 %v530, 1e-05
          %v539 = vadd.f32 %v531, 1e-05
          %v540 = vadd.f32 %v532, 1e-05
          %v541 = vadd.f32 %v533, 1e-05
          %v542 = vadd.f32 %v534, 1e-05
          %v543 = vadd.f32 %v535, 1e-05
          %v544 = vadd.f32 %v536, 1e-05
          %v545 = vrsqrt.pop %v537
          %v546 = vrsqrt.pop %v538
          %v547 = vrsqrt.pop %v539
          %v548 = vrsqrt.pop %v540
          %v549 = vrsqrt.pop %v541
          %v550 = vrsqrt.pop %v542
          %v551 = vrsqrt.pop %v543
          %v552 = vrsqrt.pop %v544
          %v553 = vmul.f32 %v465, %v545
          %v554 = vmul.f32 %v466, %v546
          %v555 = vmul.f32 %v467, %v547
          %v556 = vmul.f32 %v468, %v548
          %v557 = vmul.f32 %v469, %v549
          %v558 = vmul.f32 %v470, %v550
          %v559 = vmul.f32 %v471, %v551
          %v560 = vmul.f32 %v472, %v552
          %v561 = vld [vmem:[%s324] sm:$0x1]
          %v562 = vld [vmem:[%s324 + $0x1] sm:$0x1]
          %v563 = vld [vmem:[%s324 + $0x2] sm:$0x1]
          %v564 = vld [vmem:[%s324 + $0x3] sm:$0x1]
          %v565 = vld [vmem:[%s324 + $0x4] sm:$0x1]
          %v566 = vld [vmem:[%s324 + $0x5] sm:$0x1]
          %v567 = vld [vmem:[%s324 + $0x6] sm:$0x1]
          %v568 = vld [vmem:[%s324 + $0x7] sm:$0x1]
          %v577 = vlaneseq
          %v578 = vshrl.u32 %v577, 7
          %v579 = vsub.s32 0, %v578
          %v580 = vrot.slane %v561, %v579
          %v581 = vlaneseq
          %v582 = vshrl.u32 %v581, 7
          %v583 = vsub.s32 0, %v582
          %v584 = vrot.slane %v562, %v583
          %v585 = vlaneseq
          %v586 = vshrl.u32 %v585, 7
          %v587 = vsub.s32 0, %v586
          %v588 = vrot.slane %v563, %v587
          %v589 = vlaneseq
          %v590 = vshrl.u32 %v589, 7
          %v591 = vsub.s32 0, %v590
          %v592 = vrot.slane %v564, %v591
          %v593 = vlaneseq
          %v594 = vshrl.u32 %v593, 7
          %v595 = vsub.s32 0, %v594
          %v596 = vrot.slane %v565, %v595
          %v597 = vlaneseq
          %v598 = vshrl.u32 %v597, 7
          %v599 = vsub.s32 0, %v598
          %v600 = vrot.slane %v566, %v599
          %v601 = vlaneseq
          %v602 = vshrl.u32 %v601, 7
          %v603 = vsub.s32 0, %v602
          %v604 = vrot.slane %v567, %v603
          %v605 = vlaneseq
          %v606 = vshrl.u32 %v605, 7
          %v607 = vsub.s32 0, %v606
          %v608 = vrot.slane %v568, %v607
          %v617 = vmul.f32 %v553, %v580
          %v618 = vmul.f32 %v554, %v584
          %v619 = vmul.f32 %v555, %v588
          %v620 = vmul.f32 %v556, %v592
          %v621 = vmul.f32 %v557, %v596
          %v622 = vmul.f32 %v558, %v600
          %v623 = vmul.f32 %v559, %v604
          %v624 = vmul.f32 %v560, %v608
          %v625 = vld [vmem:[%s333] sm:$0x1]
          %v626 = vld [vmem:[%s333 + $0x1] sm:$0x1]
          %v627 = vld [vmem:[%s333 + $0x2] sm:$0x1]
          %v628 = vld [vmem:[%s333 + $0x3] sm:$0x1]
          %v629 = vld [vmem:[%s333 + $0x4] sm:$0x1]
          %v630 = vld [vmem:[%s333 + $0x5] sm:$0x1]
          %v631 = vld [vmem:[%s333 + $0x6] sm:$0x1]
          %v632 = vld [vmem:[%s333 + $0x7] sm:$0x1]
          %v641 = vlaneseq
          %v642 = vshrl.u32 %v641, 7
          %v643 = vsub.s32 0, %v642
          %v644 = vrot.slane %v625, %v643
          %v645 = vlaneseq
          %v646 = vshrl.u32 %v645, 7
          %v647 = vsub.s32 0, %v646
          %v648 = vrot.slane %v626, %v647
          %v649 = vlaneseq
          %v650 = vshrl.u32 %v649, 7
          %v651 = vsub.s32 0, %v650
          %v652 = vrot.slane %v627, %v651
          %v653 = vlaneseq
          %v654 = vshrl.u32 %v653, 7
          %v655 = vsub.s32 0, %v654
          %v656 = vrot.slane %v628, %v655
          %v657 = vlaneseq
          %v658 = vshrl.u32 %v657, 7
          %v659 = vsub.s32 0, %v658
          %v660 = vrot.slane %v629, %v659
          %v661 = vlaneseq
          %v662 = vshrl.u32 %v661, 7
          %v663 = vsub.s32 0, %v662
          %v664 = vrot.slane %v630, %v663
          %v665 = vlaneseq
          %v666 = vshrl.u32 %v665, 7
          %v667 = vsub.s32 0, %v666
          %v668 = vrot.slane %v631, %v667
          %v669 = vlaneseq
          %v670 = vshrl.u32 %v669, 7
          %v671 = vsub.s32 0, %v670
          %v672 = vrot.slane %v632, %v671
          %v681 = vadd.f32 %v617, %v644
          %v682 = vadd.f32 %v618, %v648
          %v683 = vadd.f32 %v619, %v652
          %v684 = vadd.f32 %v620, %v656
          %v685 = vadd.f32 %v621, %v660
          %v686 = vadd.f32 %v622, %v664
          %v687 = vadd.f32 %v623, %v668
          %v688 = vadd.f32 %v624, %v672
          %v689 = vmul.f32 %v681, %v681
          %v690 = vmul.f32 %v682, %v682
          %v691 = vmul.f32 %v683, %v683
          %v692 = vmul.f32 %v684, %v684
          %v693 = vmul.f32 %v685, %v685
          %v694 = vmul.f32 %v686, %v686
          %v695 = vmul.f32 %v687, %v687
          %v696 = vmul.f32 %v688, %v688
          %697 = vadd.xlane.f32.xlu0 %v689
          %v698 = vpop.xlane.xlu0 %697
          %699 = vadd.xlane.f32.xlu0 %v690
          %v700 = vpop.xlane.xlu0 %699
          %701 = vadd.xlane.f32.xlu0 %v691
          %v702 = vpop.xlane.xlu0 %701
          %703 = vadd.xlane.f32.xlu0 %v692
          %v704 = vpop.xlane.xlu0 %703
          %705 = vadd.xlane.f32.xlu0 %v693
          %v706 = vpop.xlane.xlu0 %705
          %707 = vadd.xlane.f32.xlu0 %v694
          %v708 = vpop.xlane.xlu0 %707
          %709 = vadd.xlane.f32.xlu0 %v695
          %v710 = vpop.xlane.xlu0 %709
          %711 = vadd.xlane.f32.xlu0 %v696
          %v712 = vpop.xlane.xlu0 %711
          %v713 = vmax.f32 %v698, 1e-24
          %v714 = vmax.f32 %v700, 1e-24
          %v715 = vmax.f32 %v702, 1e-24
          %v716 = vmax.f32 %v704, 1e-24
          %v717 = vmax.f32 %v706, 1e-24
          %v718 = vmax.f32 %v708, 1e-24
          %v719 = vmax.f32 %v710, 1e-24
          %v720 = vmax.f32 %v712, 1e-24
          %v721 = vrsqrt.pop %v713
          %v722 = vrsqrt.pop %v714
          %v723 = vrsqrt.pop %v715
          %v724 = vrsqrt.pop %v716
          %v725 = vrsqrt.pop %v717
          %v726 = vrsqrt.pop %v718
          %v727 = vrsqrt.pop %v719
          %v728 = vrsqrt.pop %v720
          %v729 = vmul.f32 %v681, %v721
          %v730 = vmul.f32 %v682, %v722
          %v731 = vmul.f32 %v683, %v723
          %v732 = vmul.f32 %v684, %v724
          %v733 = vmul.f32 %v685, %v725
          %v734 = vmul.f32 %v686, %v726
          %v735 = vmul.f32 %v687, %v727
          %v736 = vmul.f32 %v688, %v728
          %737 = vst [vmem:[%s381] sm:$0xff] %v729
          %738 = vst [vmem:[%s381 + $0x8] sm:$0xff] %v730
          %739 = vst [vmem:[%s381 + $0x10] sm:$0xff] %v731
          %740 = vst [vmem:[%s381 + $0x18] sm:$0xff] %v732
          %741 = vst [vmem:[%s381 + $0x20] sm:$0xff] %v733
          %742 = vst [vmem:[%s381 + $0x28] sm:$0xff] %v734
          %743 = vst [vmem:[%s381 + $0x30] sm:$0xff] %v735
          %744 = vst [vmem:[%s381 + $0x38] sm:$0xff] %v736
          %v745 = vpack.c.bf16 %v729, %v729
          %v746 = vpack.c.bf16 %v730, %v730
          %v747 = vpack.c.bf16 %v731, %v731
          %v748 = vpack.c.bf16 %v732, %v732
          %v749 = vpack.c.bf16 %v733, %v733
          %v750 = vpack.c.bf16 %v734, %v734
          %v751 = vpack.c.bf16 %v735, %v735
          %v752 = vpack.c.bf16 %v736, %v736
          %753 = vst [vmem:[#allocation2] sm:$0xf] %v745
          %754 = vst [vmem:[#allocation2 + $0x4] sm:$0xf] %v746
          %755 = vst [vmem:[#allocation2 + $0x8] sm:$0xf] %v747
          %756 = vst [vmem:[#allocation2 + $0xc] sm:$0xf] %v748
          %757 = vst [vmem:[#allocation2 + $0x10] sm:$0xf] %v749
          %758 = vst [vmem:[#allocation2 + $0x14] sm:$0xf] %v750
          %759 = vst [vmem:[#allocation2 + $0x18] sm:$0xf] %v751
          %760 = vst [vmem:[#allocation2 + $0x1c] sm:$0xf] %v752
        $region56: #{tpu_custom_call.1} parent=35 // pred_fallthru
          _
        %v761 = vld [vmem:[#allocation2] sm:$0xf]
        %v762 = vld [vmem:[#allocation2 + $0x4] sm:$0xf]
        %v763 = vld [vmem:[#allocation2 + $0x8] sm:$0xf]
        %v764 = vld [vmem:[#allocation2 + $0xc] sm:$0xf]
        %v765 = vld [vmem:[#allocation2 + $0x10] sm:$0xf]
        %v766 = vld [vmem:[#allocation2 + $0x14] sm:$0xf]
        %v767 = vld [vmem:[#allocation2 + $0x18] sm:$0xf]
        %v768 = vld [vmem:[#allocation2 + $0x1c] sm:$0xf]
        %v769 = vld [vmem:[%s342] sm:$0xf]
        %v770 = vld [vmem:[%s342 + $0x4] sm:$0xf]
        %v771 = vld [vmem:[%s342 + $0x8] sm:$0xf]
        %v772 = vld [vmem:[%s342 + $0xc] sm:$0xf]
        %v773 = vld [vmem:[%s342 + $0x10] sm:$0xf]
        %v774 = vld [vmem:[%s342 + $0x14] sm:$0xf]
        %v775 = vld [vmem:[%s342 + $0x18] sm:$0xf]
        %v776 = vld [vmem:[%s342 + $0x1c] sm:$0xf]
        %v777 = vld [vmem:[%s342 + $0x20] sm:$0xf]
        %v778 = vld [vmem:[%s342 + $0x24] sm:$0xf]
        %v779 = vld [vmem:[%s342 + $0x28] sm:$0xf]
        %v780 = vld [vmem:[%s342 + $0x2c] sm:$0xf]
        %v781 = vld [vmem:[%s342 + $0x30] sm:$0xf]
        %v782 = vld [vmem:[%s342 + $0x34] sm:$0xf]
        %v783 = vld [vmem:[%s342 + $0x38] sm:$0xf]
        %v784 = vld [vmem:[%s342 + $0x3c] sm:$0xf]
        %v785 = vld [vmem:[%s342 + $0x40] sm:$0xf]
        %v786 = vld [vmem:[%s342 + $0x44] sm:$0xf]
        %v787 = vld [vmem:[%s342 + $0x48] sm:$0xf]
        %v788 = vld [vmem:[%s342 + $0x4c] sm:$0xf]
        %v789 = vld [vmem:[%s342 + $0x50] sm:$0xf]
        %v790 = vld [vmem:[%s342 + $0x54] sm:$0xf]
        %v791 = vld [vmem:[%s342 + $0x58] sm:$0xf]
        %v792 = vld [vmem:[%s342 + $0x5c] sm:$0xf]
        %v793 = vld [vmem:[%s342 + $0x60] sm:$0xf]
        %v794 = vld [vmem:[%s342 + $0x64] sm:$0xf]
        %v795 = vld [vmem:[%s342 + $0x68] sm:$0xf]
        %v796 = vld [vmem:[%s342 + $0x6c] sm:$0xf]
        %v797 = vld [vmem:[%s342 + $0x70] sm:$0xf]
        %v798 = vld [vmem:[%s342 + $0x74] sm:$0xf]
        %v799 = vld [vmem:[%s342 + $0x78] sm:$0xf]
        %v800 = vld [vmem:[%s342 + $0x7c] sm:$0xf]
        %v801 = vld [vmem:[%s342 + $0x80] sm:$0xf]
        %v802 = vld [vmem:[%s342 + $0x84] sm:$0xf]
        %v803 = vld [vmem:[%s342 + $0x88] sm:$0xf]
        %v804 = vld [vmem:[%s342 + $0x8c] sm:$0xf]
        %v805 = vld [vmem:[%s342 + $0x90] sm:$0xf]
        %v806 = vld [vmem:[%s342 + $0x94] sm:$0xf]
        %v807 = vld [vmem:[%s342 + $0x98] sm:$0xf]
        %v808 = vld [vmem:[%s342 + $0x9c] sm:$0xf]
        %v809 = vld [vmem:[%s342 + $0xa0] sm:$0xf]
        %v810 = vld [vmem:[%s342 + $0xa4] sm:$0xf]
        %v811 = vld [vmem:[%s342 + $0xa8] sm:$0xf]
        %v812 = vld [vmem:[%s342 + $0xac] sm:$0xf]
        %v813 = vld [vmem:[%s342 + $0xb0] sm:$0xf]
        %v814 = vld [vmem:[%s342 + $0xb4] sm:$0xf]
        %v815 = vld [vmem:[%s342 + $0xb8] sm:$0xf]
        %v816 = vld [vmem:[%s342 + $0xbc] sm:$0xf]
        %v817 = vld [vmem:[%s342 + $0xc0] sm:$0xf]
        %v818 = vld [vmem:[%s342 + $0xc4] sm:$0xf]
        %v819 = vld [vmem:[%s342 + $0xc8] sm:$0xf]
        %v820 = vld [vmem:[%s342 + $0xcc] sm:$0xf]
        %v821 = vld [vmem:[%s342 + $0xd0] sm:$0xf]
        %v822 = vld [vmem:[%s342 + $0xd4] sm:$0xf]
        %v823 = vld [vmem:[%s342 + $0xd8] sm:$0xf]
        %v824 = vld [vmem:[%s342 + $0xdc] sm:$0xf]
        %v825 = vld [vmem:[%s342 + $0xe0] sm:$0xf]
        %v826 = vld [vmem:[%s342 + $0xe4] sm:$0xf]
        %v827 = vld [vmem:[%s342 + $0xe8] sm:$0xf]
        %v828 = vld [vmem:[%s342 + $0xec] sm:$0xf]
        %v829 = vld [vmem:[%s342 + $0xf0] sm:$0xf]
        %v830 = vld [vmem:[%s342 + $0xf4] sm:$0xf]
        %v831 = vld [vmem:[%s342 + $0xf8] sm:$0xf]
        %v832 = vld [vmem:[%s342 + $0xfc] sm:$0xf]
        %v833 = vld [vmem:[%s342 + $0x100] sm:$0xf]
        %v834 = vld [vmem:[%s342 + $0x104] sm:$0xf]
        %v835 = vld [vmem:[%s342 + $0x108] sm:$0xf]
        %v836 = vld [vmem:[%s342 + $0x10c] sm:$0xf]
        %v837 = vld [vmem:[%s342 + $0x110] sm:$0xf]
        %v838 = vld [vmem:[%s342 + $0x114] sm:$0xf]
        %v839 = vld [vmem:[%s342 + $0x118] sm:$0xf]
        %v840 = vld [vmem:[%s342 + $0x11c] sm:$0xf]
        %v841 = vld [vmem:[%s342 + $0x120] sm:$0xf]
        %v842 = vld [vmem:[%s342 + $0x124] sm:$0xf]
        %v843 = vld [vmem:[%s342 + $0x128] sm:$0xf]
        %v844 = vld [vmem:[%s342 + $0x12c] sm:$0xf]
        %v845 = vld [vmem:[%s342 + $0x130] sm:$0xf]
        %v846 = vld [vmem:[%s342 + $0x134] sm:$0xf]
        %v847 = vld [vmem:[%s342 + $0x138] sm:$0xf]
        %v848 = vld [vmem:[%s342 + $0x13c] sm:$0xf]
        %v849 = vld [vmem:[%s342 + $0x140] sm:$0xf]
        %v850 = vld [vmem:[%s342 + $0x144] sm:$0xf]
        %v851 = vld [vmem:[%s342 + $0x148] sm:$0xf]
        %v852 = vld [vmem:[%s342 + $0x14c] sm:$0xf]
        %v853 = vld [vmem:[%s342 + $0x150] sm:$0xf]
        %v854 = vld [vmem:[%s342 + $0x154] sm:$0xf]
        %v855 = vld [vmem:[%s342 + $0x158] sm:$0xf]
        %v856 = vld [vmem:[%s342 + $0x15c] sm:$0xf]
        %v857 = vld [vmem:[%s342 + $0x160] sm:$0xf]
        %v858 = vld [vmem:[%s342 + $0x164] sm:$0xf]
        %v859 = vld [vmem:[%s342 + $0x168] sm:$0xf]
        %v860 = vld [vmem:[%s342 + $0x16c] sm:$0xf]
        %v861 = vld [vmem:[%s342 + $0x170] sm:$0xf]
        %v862 = vld [vmem:[%s342 + $0x174] sm:$0xf]
        %v863 = vld [vmem:[%s342 + $0x178] sm:$0xf]
        %v864 = vld [vmem:[%s342 + $0x17c] sm:$0xf]
        %v865 = vld [vmem:[%s342 + $0x180] sm:$0xf]
        %v866 = vld [vmem:[%s342 + $0x184] sm:$0xf]
        %v867 = vld [vmem:[%s342 + $0x188] sm:$0xf]
        %v868 = vld [vmem:[%s342 + $0x18c] sm:$0xf]
        %v869 = vld [vmem:[%s342 + $0x190] sm:$0xf]
        %v870 = vld [vmem:[%s342 + $0x194] sm:$0xf]
        %v871 = vld [vmem:[%s342 + $0x198] sm:$0xf]
        %v872 = vld [vmem:[%s342 + $0x19c] sm:$0xf]
        %v873 = vld [vmem:[%s342 + $0x1a0] sm:$0xf]
        %v874 = vld [vmem:[%s342 + $0x1a4] sm:$0xf]
        %v875 = vld [vmem:[%s342 + $0x1a8] sm:$0xf]
        %v876 = vld [vmem:[%s342 + $0x1ac] sm:$0xf]
        %v877 = vld [vmem:[%s342 + $0x1b0] sm:$0xf]
        %v878 = vld [vmem:[%s342 + $0x1b4] sm:$0xf]
        %v879 = vld [vmem:[%s342 + $0x1b8] sm:$0xf]
        %v880 = vld [vmem:[%s342 + $0x1bc] sm:$0xf]
        %v881 = vld [vmem:[%s342 + $0x1c0] sm:$0xf]
        %v882 = vld [vmem:[%s342 + $0x1c4] sm:$0xf]
        %v883 = vld [vmem:[%s342 + $0x1c8] sm:$0xf]
        %v884 = vld [vmem:[%s342 + $0x1cc] sm:$0xf]
        %v885 = vld [vmem:[%s342 + $0x1d0] sm:$0xf]
        %v886 = vld [vmem:[%s342 + $0x1d4] sm:$0xf]
        %v887 = vld [vmem:[%s342 + $0x1d8] sm:$0xf]
        %v888 = vld [vmem:[%s342 + $0x1dc] sm:$0xf]
        %v889 = vld [vmem:[%s342 + $0x1e0] sm:$0xf]
        %v890 = vld [vmem:[%s342 + $0x1e4] sm:$0xf]
        %v891 = vld [vmem:[%s342 + $0x1e8] sm:$0xf]
        %v892 = vld [vmem:[%s342 + $0x1ec] sm:$0xf]
        %v893 = vld [vmem:[%s342 + $0x1f0] sm:$0xf]
        %v894 = vld [vmem:[%s342 + $0x1f4] sm:$0xf]
        %v895 = vld [vmem:[%s342 + $0x1f8] sm:$0xf]
        %v896 = vld [vmem:[%s342 + $0x1fc] sm:$0xf]
        %v913 = vunpack.c.l.b16 %v769
        %v914 = vunpack.c.l.b16 %v770
        %v915 = vunpack.c.l.b16 %v771
        %v916 = vunpack.c.l.b16 %v772
        %v917 = vunpack.c.l.b16 %v773
        %v918 = vunpack.c.l.b16 %v774
        %v919 = vunpack.c.l.b16 %v775
        %v920 = vunpack.c.l.b16 %v776
        %v921 = vunpack.c.l.b16 %v777
        %v922 = vunpack.c.l.b16 %v778
        %v923 = vunpack.c.l.b16 %v779
        %v924 = vunpack.c.l.b16 %v780
        %v925 = vunpack.c.l.b16 %v781
        %v926 = vunpack.c.l.b16 %v782
        %v927 = vunpack.c.l.b16 %v783
        %v928 = vunpack.c.l.b16 %v784
        %v929 = vpack.c.b16 %v914, %v913
        %v930 = vpack.c.b16 %v916, %v915
        %v931 = vpack.c.b16 %v918, %v917
        %v932 = vpack.c.b16 %v920, %v919
        %v933 = vpack.c.b16 %v922, %v921
        %v934 = vpack.c.b16 %v924, %v923
        %v935 = vpack.c.b16 %v926, %v925
        %v936 = vpack.c.b16 %v928, %v927
        %945 = vmatprep.subr.bf16.mxu0 0
        %946 = vmatpush1.bf16.msra.mxu0 %v936
        %947 = vmatprep.subr.bf16.mxu0 0
        %948 = vmatpush1.bf16.msra.mxu0 %v935
        %949 = vmatprep.subr.bf16.mxu0 0
        %950 = vmatpush1.bf16.msra.mxu0 %v934
        %951 = vmatprep.subr.bf16.mxu0 0
        %952 = vmatpush1.bf16.msra.mxu0 %v933
        %953 = vmatprep.subr.bf16.mxu0 0
        %954 = vmatpush1.bf16.msra.mxu0 %v932
        %955 = vmatprep.subr.bf16.mxu0 0
        %956 = vmatpush1.bf16.msra.mxu0 %v931
        %957 = vmatprep.subr.bf16.mxu0 0
        %958 = vmatpush1.bf16.msra.mxu0 %v930
        %959 = vmatprep.subr.bf16.mxu0 0
        %960 = vmatpush1.bf16.msra.mxu0 %v929
        %961 = vmatprep.subr.bf16.mxu0 0
        %962 = vmatpush2.bf16.msra.mxu0 0
        %963 = vmatprep.subr.bf16.mxu0 0
        %964 = vmatpush2.bf16.msra.mxu0 0
        %965 = vmatprep.subr.bf16.mxu0 0
        %966 = vmatpush2.bf16.msra.mxu0 0
        %967 = vmatprep.subr.bf16.mxu0 0
        %968 = vmatpush2.bf16.msra.mxu0 0
        %969 = vmatprep.subr.bf16.mxu0 0
        %970 = vmatpush2.bf16.msra.mxu0 0
        %971 = vmatprep.subr.bf16.mxu0 0
        %972 = vmatpush2.bf16.msra.mxu0 0
        %973 = vmatprep.subr.bf16.mxu0 0
        %974 = vmatpush2.bf16.msra.mxu0 0
        %975 = vmatprep.subr.bf16.mxu0 0
        %976 = vmatpush2.bf16.msra.mxu0 0
        %977 = vmatprep.mubr.bf16.mxu0 0
        %978 = vmatmul.mubr.bf16.gmra.mxu0 %v761
        %v979 = vpop.f32.mrf.mxu0
        %v980 = vadd.f32 0.0, %v979
        %v981 = vpop.f32.mrf.mxu0
        %v982 = vpop.f32.mrf.mxu0
        %v983 = vpop.f32.mrf.mxu0
        %984 = vdwg.mxu0
        %v1001 = vunpack.c.l.b16 %v785
        %v1002 = vunpack.c.l.b16 %v786
        %v1003 = vunpack.c.l.b16 %v787
        %v1004 = vunpack.c.l.b16 %v788
        %v1005 = vunpack.c.l.b16 %v789
        %v1006 = vunpack.c.l.b16 %v790
        %v1007 = vunpack.c.l.b16 %v791
        %v1008 = vunpack.c.l.b16 %v792
        %v1009 = vunpack.c.l.b16 %v793
        %v1010 = vunpack.c.l.b16 %v794
        %v1011 = vunpack.c.l.b16 %v795
        %v1012 = vunpack.c.l.b16 %v796
        %v1013 = vunpack.c.l.b16 %v797
        %v1014 = vunpack.c.l.b16 %v798
        %v1015 = vunpack.c.l.b16 %v799
        %v1016 = vunpack.c.l.b16 %v800
        %v1017 = vpack.c.b16 %v1002, %v1001
        %v1018 = vpack.c.b16 %v1004, %v1003
        %v1019 = vpack.c.b16 %v1006, %v1005
        %v1020 = vpack.c.b16 %v1008, %v1007
        %v1021 = vpack.c.b16 %v1010, %v1009
        %v1022 = vpack.c.b16 %v1012, %v1011
        %v1023 = vpack.c.b16 %v1014, %v1013
        %v1024 = vpack.c.b16 %v1016, %v1015
        %1033 = vmatprep.subr.bf16.mxu0 0
        %1034 = vmatpush1.bf16.msra.mxu0 %v1024
        %1035 = vmatprep.subr.bf16.mxu0 0
        %1036 = vmatpush1.bf16.msra.mxu0 %v1023
        %1037 = vmatprep.subr.bf16.mxu0 0
        %1038 = vmatpush1.bf16.msra.mxu0 %v1022
        %1039 = vmatprep.subr.bf16.mxu0 0
        %1040 = vmatpush1.bf16.msra.mxu0 %v1021
        %1041 = vmatprep.subr.bf16.mxu0 0
        %1042 = vmatpush1.bf16.msra.mxu0 %v1020
        %1043 = vmatprep.subr.bf16.mxu0 0
        %1044 = vmatpush1.bf16.msra.mxu0 %v1019
        %1045 = vmatprep.subr.bf16.mxu0 0
        %1046 = vmatpush1.bf16.msra.mxu0 %v1018
        %1047 = vmatprep.subr.bf16.mxu0 0
        %1048 = vmatpush1.bf16.msra.mxu0 %v1017
        %1049 = vmatprep.subr.bf16.mxu0 0
        %1050 = vmatpush2.bf16.msra.mxu0 0
        %1051 = vmatprep.subr.bf16.mxu0 0
        %1052 = vmatpush2.bf16.msra.mxu0 0
        %1053 = vmatprep.subr.bf16.mxu0 0
        %1054 = vmatpush2.bf16.msra.mxu0 0
        %1055 = vmatprep.subr.bf16.mxu0 0
        %1056 = vmatpush2.bf16.msra.mxu0 0
        %1057 = vmatprep.subr.bf16.mxu0 0
        %1058 = vmatpush2.bf16.msra.mxu0 0
        %1059 = vmatprep.subr.bf16.mxu0 0
        %1060 = vmatpush2.bf16.msra.mxu0 0
        %1061 = vmatprep.subr.bf16.mxu0 0
        %1062 = vmatpush2.bf16.msra.mxu0 0
        %1063 = vmatprep.subr.bf16.mxu0 0
        %1064 = vmatpush2.bf16.msra.mxu0 0
        %1065 = vmatprep.mubr.bf16.mxu0 0
        %1066 = vmatmul.mubr.bf16.gmra.mxu0 %v762
        %v1067 = vpop.f32.mrf.mxu0
        %v1068 = vadd.f32 0.0, %v1067
        %v1069 = vpop.f32.mrf.mxu0
        %v1070 = vpop.f32.mrf.mxu0
        %v1071 = vpop.f32.mrf.mxu0
        %1072 = vdwg.mxu0
        %v1089 = vunpack.c.l.b16 %v801
        %v1090 = vunpack.c.l.b16 %v802
        %v1091 = vunpack.c.l.b16 %v803
        %v1092 = vunpack.c.l.b16 %v804
        %v1093 = vunpack.c.l.b16 %v805
        %v1094 = vunpack.c.l.b16 %v806
        %v1095 = vunpack.c.l.b16 %v807
        %v1096 = vunpack.c.l.b16 %v808
        %v1097 = vunpack.c.l.b16 %v809
        %v1098 = vunpack.c.l.b16 %v810
        %v1099 = vunpack.c.l.b16 %v811
        %v1100 = vunpack.c.l.b16 %v812
        %v1101 = vunpack.c.l.b16 %v813
        %v1102 = vunpack.c.l.b16 %v814
        %v1103 = vunpack.c.l.b16 %v815
        %v1104 = vunpack.c.l.b16 %v816
        %v1105 = vpack.c.b16 %v1090, %v1089
        %v1106 = vpack.c.b16 %v1092, %v1091
        %v1107 = vpack.c.b16 %v1094, %v1093
        %v1108 = vpack.c.b16 %v1096, %v1095
        %v1109 = vpack.c.b16 %v1098, %v1097
        %v1110 = vpack.c.b16 %v1100, %v1099
        %v1111 = vpack.c.b16 %v1102, %v1101
        %v1112 = vpack.c.b16 %v1104, %v1103
        %1121 = vmatprep.subr.bf16.mxu0 0
        %1122 = vmatpush1.bf16.msra.mxu0 %v1112
        %1123 = vmatprep.subr.bf16.mxu0 0
        %1124 = vmatpush1.bf16.msra.mxu0 %v1111
        %1125 = vmatprep.subr.bf16.mxu0 0
        %1126 = vmatpush1.bf16.msra.mxu0 %v1110
        %1127 = vmatprep.subr.bf16.mxu0 0
        %1128 = vmatpush1.bf16.msra.mxu0 %v1109
        %1129 = vmatprep.subr.bf16.mxu0 0
        %1130 = vmatpush1.bf16.msra.mxu0 %v1108
        %1131 = vmatprep.subr.bf16.mxu0 0
        %1132 = vmatpush1.bf16.msra.mxu0 %v1107
        %1133 = vmatprep.subr.bf16.mxu0 0
        %1134 = vmatpush1.bf16.msra.mxu0 %v1106
        %1135 = vmatprep.subr.bf16.mxu0 0
        %1136 = vmatpush1.bf16.msra.mxu0 %v1105
        %1137 = vmatprep.subr.bf16.mxu0 0
        %1138 = vmatpush2.bf16.msra.mxu0 0
        %1139 = vmatprep.subr.bf16.mxu0 0
        %1140 = vmatpush2.bf16.msra.mxu0 0
        %1141 = vmatprep.subr.bf16.mxu0 0
        %1142 = vmatpush2.bf16.msra.mxu0 0
        %1143 = vmatprep.subr.bf16.mxu0 0
        %1144 = vmatpush2.bf16.msra.mxu0 0
        %1145 = vmatprep.subr.bf16.mxu0 0
        %1146 = vmatpush2.bf16.msra.mxu0 0
        %1147 = vmatprep.subr.bf16.mxu0 0
        %1148 = vmatpush2.bf16.msra.mxu0 0
        %1149 = vmatprep.subr.bf16.mxu0 0
        %1150 = vmatpush2.bf16.msra.mxu0 0
        %1151 = vmatprep.subr.bf16.mxu0 0
        %1152 = vmatpush2.bf16.msra.mxu0 0
        %1153 = vmatprep.mubr.bf16.mxu0 0
        %1154 = vmatmul.mubr.bf16.gmra.mxu0 %v763
        %v1155 = vpop.f32.mrf.mxu0
        %v1156 = vadd.f32 0.0, %v1155
        %v1157 = vpop.f32.mrf.mxu0
        %v1158 = vpop.f32.mrf.mxu0
        %v1159 = vpop.f32.mrf.mxu0
        %1160 = vdwg.mxu0
        %v1177 = vunpack.c.l.b16 %v817
        %v1178 = vunpack.c.l.b16 %v818
        %v1179 = vunpack.c.l.b16 %v819
        %v1180 = vunpack.c.l.b16 %v820
        %v1181 = vunpack.c.l.b16 %v821
        %v1182 = vunpack.c.l.b16 %v822
        %v1183 = vunpack.c.l.b16 %v823
        %v1184 = vunpack.c.l.b16 %v824
        %v1185 = vunpack.c.l.b16 %v825
        %v1186 = vunpack.c.l.b16 %v826
        %v1187 = vunpack.c.l.b16 %v827
        %v1188 = vunpack.c.l.b16 %v828
        %v1189 = vunpack.c.l.b16 %v829
        %v1190 = vunpack.c.l.b16 %v830
        %v1191 = vunpack.c.l.b16 %v831
        %v1192 = vunpack.c.l.b16 %v832
        %v1193 = vpack.c.b16 %v1178, %v1177
        %v1194 = vpack.c.b16 %v1180, %v1179
        %v1195 = vpack.c.b16 %v1182, %v1181
        %v1196 = vpack.c.b16 %v1184, %v1183
        %v1197 = vpack.c.b16 %v1186, %v1185
        %v1198 = vpack.c.b16 %v1188, %v1187
        %v1199 = vpack.c.b16 %v1190, %v1189
        %v1200 = vpack.c.b16 %v1192, %v1191
        %1209 = vmatprep.subr.bf16.mxu0 0
        %1210 = vmatpush1.bf16.msra.mxu0 %v1200
        %1211 = vmatprep.subr.bf16.mxu0 0
        %1212 = vmatpush1.bf16.msra.mxu0 %v1199
        %1213 = vmatprep.subr.bf16.mxu0 0
        %1214 = vmatpush1.bf16.msra.mxu0 %v1198
        %1215 = vmatprep.subr.bf16.mxu0 0
        %1216 = vmatpush1.bf16.msra.mxu0 %v1197
        %1217 = vmatprep.subr.bf16.mxu0 0
        %1218 = vmatpush1.bf16.msra.mxu0 %v1196
        %1219 = vmatprep.subr.bf16.mxu0 0
        %1220 = vmatpush1.bf16.msra.mxu0 %v1195
        %1221 = vmatprep.subr.bf16.mxu0 0
        %1222 = vmatpush1.bf16.msra.mxu0 %v1194
        %1223 = vmatprep.subr.bf16.mxu0 0
        %1224 = vmatpush1.bf16.msra.mxu0 %v1193
        %1225 = vmatprep.subr.bf16.mxu0 0
        %1226 = vmatpush2.bf16.msra.mxu0 0
        %1227 = vmatprep.subr.bf16.mxu0 0
        %1228 = vmatpush2.bf16.msra.mxu0 0
        %1229 = vmatprep.subr.bf16.mxu0 0
        %1230 = vmatpush2.bf16.msra.mxu0 0
        %1231 = vmatprep.subr.bf16.mxu0 0
        %1232 = vmatpush2.bf16.msra.mxu0 0
        %1233 = vmatprep.subr.bf16.mxu0 0
        %1234 = vmatpush2.bf16.msra.mxu0 0
        %1235 = vmatprep.subr.bf16.mxu0 0
        %1236 = vmatpush2.bf16.msra.mxu0 0
        %1237 = vmatprep.subr.bf16.mxu0 0
        %1238 = vmatpush2.bf16.msra.mxu0 0
        %1239 = vmatprep.subr.bf16.mxu0 0
        %1240 = vmatpush2.bf16.msra.mxu0 0
        %1241 = vmatprep.mubr.bf16.mxu0 0
        %1242 = vmatmul.mubr.bf16.gmra.mxu0 %v764
        %v1243 = vpop.f32.mrf.mxu0
        %v1244 = vadd.f32 0.0, %v1243
        %v1245 = vpop.f32.mrf.mxu0
        %v1246 = vpop.f32.mrf.mxu0
        %v1247 = vpop.f32.mrf.mxu0
        %1248 = vdwg.mxu0
        %v1265 = vunpack.c.l.b16 %v833
        %v1266 = vunpack.c.l.b16 %v834
        %v1267 = vunpack.c.l.b16 %v835
        %v1268 = vunpack.c.l.b16 %v836
        %v1269 = vunpack.c.l.b16 %v837
        %v1270 = vunpack.c.l.b16 %v838
        %v1271 = vunpack.c.l.b16 %v839
        %v1272 = vunpack.c.l.b16 %v840
        %v1273 = vunpack.c.l.b16 %v841
        %v1274 = vunpack.c.l.b16 %v842
        %v1275 = vunpack.c.l.b16 %v843
        %v1276 = vunpack.c.l.b16 %v844
        %v1277 = vunpack.c.l.b16 %v845
        %v1278 = vunpack.c.l.b16 %v846
        %v1279 = vunpack.c.l.b16 %v847
        %v1280 = vunpack.c.l.b16 %v848
        %v1281 = vpack.c.b16 %v1266, %v1265
        %v1282 = vpack.c.b16 %v1268, %v1267
        %v1283 = vpack.c.b16 %v1270, %v1269
        %v1284 = vpack.c.b16 %v1272, %v1271
        %v1285 = vpack.c.b16 %v1274, %v1273
        %v1286 = vpack.c.b16 %v1276, %v1275
        %v1287 = vpack.c.b16 %v1278, %v1277
        %v1288 = vpack.c.b16 %v1280, %v1279
        %1297 = vmatprep.subr.bf16.mxu0 0
        %1298 = vmatpush1.bf16.msra.mxu0 %v1288
        %1299 = vmatprep.subr.bf16.mxu0 0
        %1300 = vmatpush1.bf16.msra.mxu0 %v1287
        %1301 = vmatprep.subr.bf16.mxu0 0
        %1302 = vmatpush1.bf16.msra.mxu0 %v1286
        %1303 = vmatprep.subr.bf16.mxu0 0
        %1304 = vmatpush1.bf16.msra.mxu0 %v1285
        %1305 = vmatprep.subr.bf16.mxu0 0
        %1306 = vmatpush1.bf16.msra.mxu0 %v1284
        %1307 = vmatprep.subr.bf16.mxu0 0
        %1308 = vmatpush1.bf16.msra.mxu0 %v1283
        %1309 = vmatprep.subr.bf16.mxu0 0
        %1310 = vmatpush1.bf16.msra.mxu0 %v1282
        %1311 = vmatprep.subr.bf16.mxu0 0
        %1312 = vmatpush1.bf16.msra.mxu0 %v1281
        %1313 = vmatprep.subr.bf16.mxu0 0
        %1314 = vmatpush2.bf16.msra.mxu0 0
        %1315 = vmatprep.subr.bf16.mxu0 0
        %1316 = vmatpush2.bf16.msra.mxu0 0
        %1317 = vmatprep.subr.bf16.mxu0 0
        %1318 = vmatpush2.bf16.msra.mxu0 0
        %1319 = vmatprep.subr.bf16.mxu0 0
        %1320 = vmatpush2.bf16.msra.mxu0 0
        %1321 = vmatprep.subr.bf16.mxu0 0
        %1322 = vmatpush2.bf16.msra.mxu0 0
        %1323 = vmatprep.subr.bf16.mxu0 0
        %1324 = vmatpush2.bf16.msra.mxu0 0
        %1325 = vmatprep.subr.bf16.mxu0 0
        %1326 = vmatpush2.bf16.msra.mxu0 0
        %1327 = vmatprep.subr.bf16.mxu0 0
        %1328 = vmatpush2.bf16.msra.mxu0 0
        %1329 = vmatprep.mubr.bf16.mxu0 0
        %1330 = vmatmul.mubr.bf16.gmra.mxu0 %v765
        %v1331 = vpop.f32.mrf.mxu0
        %v1332 = vadd.f32 0.0, %v1331
        %v1333 = vpop.f32.mrf.mxu0
        %v1334 = vpop.f32.mrf.mxu0
        %v1335 = vpop.f32.mrf.mxu0
        %1336 = vdwg.mxu0
        %v1353 = vunpack.c.l.b16 %v849
        %v1354 = vunpack.c.l.b16 %v850
        %v1355 = vunpack.c.l.b16 %v851
        %v1356 = vunpack.c.l.b16 %v852
        %v1357 = vunpack.c.l.b16 %v853
        %v1358 = vunpack.c.l.b16 %v854
        %v1359 = vunpack.c.l.b16 %v855
        %v1360 = vunpack.c.l.b16 %v856
        %v1361 = vunpack.c.l.b16 %v857
        %v1362 = vunpack.c.l.b16 %v858
        %v1363 = vunpack.c.l.b16 %v859
        %v1364 = vunpack.c.l.b16 %v860
        %v1365 = vunpack.c.l.b16 %v861
        %v1366 = vunpack.c.l.b16 %v862
        %v1367 = vunpack.c.l.b16 %v863
        %v1368 = vunpack.c.l.b16 %v864
        %v1369 = vpack.c.b16 %v1354, %v1353
        %v1370 = vpack.c.b16 %v1356, %v1355
        %v1371 = vpack.c.b16 %v1358, %v1357
        %v1372 = vpack.c.b16 %v1360, %v1359
        %v1373 = vpack.c.b16 %v1362, %v1361
        %v1374 = vpack.c.b16 %v1364, %v1363
        %v1375 = vpack.c.b16 %v1366, %v1365
        %v1376 = vpack.c.b16 %v1368, %v1367
        %1385 = vmatprep.subr.bf16.mxu0 0
        %1386 = vmatpush1.bf16.msra.mxu0 %v1376
        %1387 = vmatprep.subr.bf16.mxu0 0
        %1388 = vmatpush1.bf16.msra.mxu0 %v1375
        %1389 = vmatprep.subr.bf16.mxu0 0
        %1390 = vmatpush1.bf16.msra.mxu0 %v1374
        %1391 = vmatprep.subr.bf16.mxu0 0
        %1392 = vmatpush1.bf16.msra.mxu0 %v1373
        %1393 = vmatprep.subr.bf16.mxu0 0
        %1394 = vmatpush1.bf16.msra.mxu0 %v1372
        %1395 = vmatprep.subr.bf16.mxu0 0
        %1396 = vmatpush1.bf16.msra.mxu0 %v1371
        %1397 = vmatprep.subr.bf16.mxu0 0
        %1398 = vmatpush1.bf16.msra.mxu0 %v1370
        %1399 = vmatprep.subr.bf16.mxu0 0
        %1400 = vmatpush1.bf16.msra.mxu0 %v1369
        %1401 = vmatprep.subr.bf16.mxu0 0
        %1402 = vmatpush2.bf16.msra.mxu0 0
        %1403 = vmatprep.subr.bf16.mxu0 0
        %1404 = vmatpush2.bf16.msra.mxu0 0
        %1405 = vmatprep.subr.bf16.mxu0 0
        %1406 = vmatpush2.bf16.msra.mxu0 0
        %1407 = vmatprep.subr.bf16.mxu0 0
        %1408 = vmatpush2.bf16.msra.mxu0 0
        %1409 = vmatprep.subr.bf16.mxu0 0
        %1410 = vmatpush2.bf16.msra.mxu0 0
        %1411 = vmatprep.subr.bf16.mxu0 0
        %1412 = vmatpush2.bf16.msra.mxu0 0
        %1413 = vmatprep.subr.bf16.mxu0 0
        %1414 = vmatpush2.bf16.msra.mxu0 0
        %1415 = vmatprep.subr.bf16.mxu0 0
        %1416 = vmatpush2.bf16.msra.mxu0 0
        %1417 = vmatprep.mubr.bf16.mxu0 0
        %1418 = vmatmul.mubr.bf16.gmra.mxu0 %v766
        %v1419 = vpop.f32.mrf.mxu0
        %v1420 = vadd.f32 0.0, %v1419
        %v1421 = vpop.f32.mrf.mxu0
        %v1422 = vpop.f32.mrf.mxu0
        %v1423 = vpop.f32.mrf.mxu0
        %1424 = vdwg.mxu0
        %v1441 = vunpack.c.l.b16 %v865
        %v1442 = vunpack.c.l.b16 %v866
        %v1443 = vunpack.c.l.b16 %v867
        %v1444 = vunpack.c.l.b16 %v868
        %v1445 = vunpack.c.l.b16 %v869
        %v1446 = vunpack.c.l.b16 %v870
        %v1447 = vunpack.c.l.b16 %v871
        %v1448 = vunpack.c.l.b16 %v872
        %v1449 = vunpack.c.l.b16 %v873
        %v1450 = vunpack.c.l.b16 %v874
        %v1451 = vunpack.c.l.b16 %v875
        %v1452 = vunpack.c.l.b16 %v876
        %v1453 = vunpack.c.l.b16 %v877
        %v1454 = vunpack.c.l.b16 %v878
        %v1455 = vunpack.c.l.b16 %v879
        %v1456 = vunpack.c.l.b16 %v880
        %v1457 = vpack.c.b16 %v1442, %v1441
        %v1458 = vpack.c.b16 %v1444, %v1443
        %v1459 = vpack.c.b16 %v1446, %v1445
        %v1460 = vpack.c.b16 %v1448, %v1447
        %v1461 = vpack.c.b16 %v1450, %v1449
        %v1462 = vpack.c.b16 %v1452, %v1451
        %v1463 = vpack.c.b16 %v1454, %v1453
        %v1464 = vpack.c.b16 %v1456, %v1455
        %1473 = vmatprep.subr.bf16.mxu0 0
        %1474 = vmatpush1.bf16.msra.mxu0 %v1464
        %1475 = vmatprep.subr.bf16.mxu0 0
        %1476 = vmatpush1.bf16.msra.mxu0 %v1463
        %1477 = vmatprep.subr.bf16.mxu0 0
        %1478 = vmatpush1.bf16.msra.mxu0 %v1462
        %1479 = vmatprep.subr.bf16.mxu0 0
        %1480 = vmatpush1.bf16.msra.mxu0 %v1461
        %1481 = vmatprep.subr.bf16.mxu0 0
        %1482 = vmatpush1.bf16.msra.mxu0 %v1460
        %1483 = vmatprep.subr.bf16.mxu0 0
        %1484 = vmatpush1.bf16.msra.mxu0 %v1459
        %1485 = vmatprep.subr.bf16.mxu0 0
        %1486 = vmatpush1.bf16.msra.mxu0 %v1458
        %1487 = vmatprep.subr.bf16.mxu0 0
        %1488 = vmatpush1.bf16.msra.mxu0 %v1457
        %1489 = vmatprep.subr.bf16.mxu0 0
        %1490 = vmatpush2.bf16.msra.mxu0 0
        %1491 = vmatprep.subr.bf16.mxu0 0
        %1492 = vmatpush2.bf16.msra.mxu0 0
        %1493 = vmatprep.subr.bf16.mxu0 0
        %1494 = vmatpush2.bf16.msra.mxu0 0
        %1495 = vmatprep.subr.bf16.mxu0 0
        %1496 = vmatpush2.bf16.msra.mxu0 0
        %1497 = vmatprep.subr.bf16.mxu0 0
        %1498 = vmatpush2.bf16.msra.mxu0 0
        %1499 = vmatprep.subr.bf16.mxu0 0
        %1500 = vmatpush2.bf16.msra.mxu0 0
        %1501 = vmatprep.subr.bf16.mxu0 0
        %1502 = vmatpush2.bf16.msra.mxu0 0
        %1503 = vmatprep.subr.bf16.mxu0 0
        %1504 = vmatpush2.bf16.msra.mxu0 0
        %1505 = vmatprep.mubr.bf16.mxu0 0
        %1506 = vmatmul.mubr.bf16.gmra.mxu0 %v767
        %v1507 = vpop.f32.mrf.mxu0
        %v1508 = vadd.f32 0.0, %v1507
        %v1509 = vpop.f32.mrf.mxu0
        %v1510 = vpop.f32.mrf.mxu0
        %v1511 = vpop.f32.mrf.mxu0
        %1512 = vdwg.mxu0
        %v1529 = vunpack.c.l.b16 %v881
        %v1530 = vunpack.c.l.b16 %v882
        %v1531 = vunpack.c.l.b16 %v883
        %v1532 = vunpack.c.l.b16 %v884
        %v1533 = vunpack.c.l.b16 %v885
        %v1534 = vunpack.c.l.b16 %v886
        %v1535 = vunpack.c.l.b16 %v887
        %v1536 = vunpack.c.l.b16 %v888
        %v1537 = vunpack.c.l.b16 %v889
        %v1538 = vunpack.c.l.b16 %v890
        %v1539 = vunpack.c.l.b16 %v891
        %v1540 = vunpack.c.l.b16 %v892
        %v1541 = vunpack.c.l.b16 %v893
        %v1542 = vunpack.c.l.b16 %v894
        %v1543 = vunpack.c.l.b16 %v895
        %v1544 = vunpack.c.l.b16 %v896
        %v1545 = vpack.c.b16 %v1530, %v1529
        %v1546 = vpack.c.b16 %v1532, %v1531
        %v1547 = vpack.c.b16 %v1534, %v1533
        %v1548 = vpack.c.b16 %v1536, %v1535
        %v1549 = vpack.c.b16 %v1538, %v1537
        %v1550 = vpack.c.b16 %v1540, %v1539
        %v1551 = vpack.c.b16 %v1542, %v1541
        %v1552 = vpack.c.b16 %v1544, %v1543
        %1561 = vmatprep.subr.bf16.mxu0 0
        %1562 = vmatpush1.bf16.msra.mxu0 %v1552
        %1563 = vmatprep.subr.bf16.mxu0 0
        %1564 = vmatpush1.bf16.msra.mxu0 %v1551
        %1565 = vmatprep.subr.bf16.mxu0 0
        %1566 = vmatpush1.bf16.msra.mxu0 %v1550
        %1567 = vmatprep.subr.bf16.mxu0 0
        %1568 = vmatpush1.bf16.msra.mxu0 %v1549
        %1569 = vmatprep.subr.bf16.mxu0 0
        %1570 = vmatpush1.bf16.msra.mxu0 %v1548
        %1571 = vmatprep.subr.bf16.mxu0 0
        %1572 = vmatpush1.bf16.msra.mxu0 %v1547
        %1573 = vmatprep.subr.bf16.mxu0 0
        %1574 = vmatpush1.bf16.msra.mxu0 %v1546
        %1575 = vmatprep.subr.bf16.mxu0 0
        %1576 = vmatpush1.bf16.msra.mxu0 %v1545
        %1577 = vmatprep.subr.bf16.mxu0 0
        %1578 = vmatpush2.bf16.msra.mxu0 0
        %1579 = vmatprep.subr.bf16.mxu0 0
        %1580 = vmatpush2.bf16.msra.mxu0 0
        %1581 = vmatprep.subr.bf16.mxu0 0
        %1582 = vmatpush2.bf16.msra.mxu0 0
        %1583 = vmatprep.subr.bf16.mxu0 0
        %1584 = vmatpush2.bf16.msra.mxu0 0
        %1585 = vmatprep.subr.bf16.mxu0 0
        %1586 = vmatpush2.bf16.msra.mxu0 0
        %1587 = vmatprep.subr.bf16.mxu0 0
        %1588 = vmatpush2.bf16.msra.mxu0 0
        %1589 = vmatprep.subr.bf16.mxu0 0
        %1590 = vmatpush2.bf16.msra.mxu0 0
        %1591 = vmatprep.subr.bf16.mxu0 0
        %1592 = vmatpush2.bf16.msra.mxu0 0
        %1593 = vmatprep.mubr.bf16.mxu0 0
        %1594 = vmatmul.mubr.bf16.gmra.mxu0 %v768
        %v1595 = vpop.f32.mrf.mxu0
        %v1596 = vadd.f32 0.0, %v1595
        %v1597 = vpop.f32.mrf.mxu0
        %v1598 = vpop.f32.mrf.mxu0
        %v1599 = vpop.f32.mrf.mxu0
        %1600 = vdwg.mxu0
        %1601 = vst [vmem:[%s388] sm:$0xff] %v980
        %1602 = vst [vmem:[%s388 + $0x8] sm:$0xff] %v1068
        %1603 = vst [vmem:[%s388 + $0x10] sm:$0xff] %v1156
        %1604 = vst [vmem:[%s388 + $0x18] sm:$0xff] %v1244
        %1605 = vst [vmem:[%s388 + $0x20] sm:$0xff] %v1332
        %1606 = vst [vmem:[%s388 + $0x28] sm:$0xff] %v1420
        %1607 = vst [vmem:[%s388 + $0x30] sm:$0xff] %v1508
        %1608 = vst [vmem:[%s388 + $0x38] sm:$0xff] %v1596
        %s1609 = sand.u32 %s158, 1
        %s1610 = scalar_lea.sflag [#allocation5], %s1609
        %s1611 = sand.u32 %s158, 1
        %s1612 = smul.addr %s1611, 64
        %s1613 = scalar_lea.vmem [#allocation11], %s1612
        %s1614 = sand.u32 %s186, 1
        %s1615 = scalar_lea.sflag [#allocation13], %s1614
        %s1616 = sand.u32 %s186, 1
        %s1617 = smul.addr %s1616, 64
        %s1618 = scalar_lea.vmem [#allocation12], %s1617
        // Predicated region
        $region57: #{tpu_custom_call.1} parent=35 // pred_check
          %p1619 = pneg %p168
        $region58: #{tpu_custom_call.1} parent=35 // pred_check_branch
          %1621 = sbr.rel (%p1619) target = $region60
        $region59: #{tpu_custom_call.1} parent=35 // pred_region
          %s1622 = smul.u32 8, %s36
          %s1624 = ssub.s32 1024, 1024
          %1625 = vsyncadd %s1610, %s1624
          %s1626 = smul.addr %s1622, 128
          %s1627 = scalar_lea.hbm %s4, %s1626
          %s1628 = sshll.u32 %s1613, 4
          %s1629 = int_to_ptr.vmem [resolvable:$true] %s1628
          %1634 = dma.vmem_to_hbm [thread:$0]  %s1629, 1024, %s1627, %s1610, 128, 128, 8
        $region60: #{tpu_custom_call.1} parent=35 // pred_fallthru
          _
        // Predicated region
        $region61: #{tpu_custom_call.1} parent=35 // pred_check
          %p1635 = pneg %p196
        $region62: #{tpu_custom_call.1} parent=35 // pred_check_branch
          %1637 = sbr.rel (%p1635) target = $region64
        $region63: #{tpu_custom_call.1} parent=35 // pred_region
          %s1638 = smul.u32 8, %s36
          %s1640 = ssub.s32 1024, 1024
          %1641 = vsyncadd %s1615, %s1640
          %s1642 = sadd.s32 %s37, %s1638
          %s1643 = smul.addr %s1642, 128
          %s1644 = scalar_lea.hbm %s5, %s1643
          %s1645 = sshll.u32 %s1618, 4
          %s1646 = int_to_ptr.vmem [resolvable:$true] %s1645
          %1651 = dma.vmem_to_hbm [thread:$0]  %s1646, 1024, %s1644, %s1615, 128, 128, 8
        $region64: #{tpu_custom_call.1} parent=35 // pred_fallthru
          _
      $region36: #{tpu_custom_call.1} parent=5 // pred_fallthru
        _
      %p1652 = scmp.le.s32.totalorder 2, %s27
      // Predicated region
      $region65: #{tpu_custom_call.1} parent=5 // pred_check
        %p1653 = pneg %p1652
      $region66: #{tpu_custom_call.1} parent=5 // pred_check_branch
        %1655 = sbr.rel (%p1653) target = $region68
      $region67: #{tpu_custom_call.1} parent=5 // pred_region
        %s1656 = ssub.s32 %s27, 2
        // Predicated region
        $region69: #{tpu_custom_call.1} parent=67 // pred_check
          %p1657 = pneg %p174
        $region70: #{tpu_custom_call.1} parent=67 // pred_check_branch
          %1659 = sbr.rel (%p1657) target = $region72
        $region71: #{tpu_custom_call.1} parent=67 // pred_region
          %s1660 = sand.u32 %s159, 1
          %s1661 = scalar_lea.sflag [#allocation5], %s1660
          %s1662 = sand.u32 %s159, 1
          %s1663 = smul.addr %s1662, 64
          %s1664 = scalar_lea.vmem [#allocation11], %s1663
          %1665 = dma.done %s1661, 1024
        $region72: #{tpu_custom_call.1} parent=67 // pred_fallthru
          _
        // Predicated region
        $region73: #{tpu_custom_call.1} parent=67 // pred_check
          %p1666 = pneg %p202
        $region74: #{tpu_custom_call.1} parent=67 // pred_check_branch
          %1668 = sbr.rel (%p1666) target = $region76
        $region75: #{tpu_custom_call.1} parent=67 // pred_region
          %s1669 = sand.u32 %s187, 1
          %s1670 = scalar_lea.sflag [#allocation13], %s1669
          %s1671 = sand.u32 %s187, 1
          %s1672 = smul.addr %s1671, 64
          %s1673 = scalar_lea.vmem [#allocation12], %s1672
          %1674 = dma.done %s1670, 1024
        $region76: #{tpu_custom_call.1} parent=67 // pred_fallthru
          _
      $region68: #{tpu_custom_call.1} parent=5 // pred_fallthru
        _
    $region6: #{tpu_custom_call.1} parent=1 // loop_footer
      %s31 = sadd.s32 1, %s27
    $region7: #{tpu_custom_call.1} parent=1 // loop_footer_branch
      %26 = sbr.rel target = $region3
    $region8: #{tpu_custom_call.1} parent=1 // loop_exit
      _
    %1675 = vsyncpa [#allocation4], 1
    %s1676 = scalar_lea.sflag [#allocation4], 1
    %1677 = vsyncpa %s1676, 1
    %1678 = vsyncpa [#allocation7], 1
    %s1679 = scalar_lea.sflag [#allocation7], 1
    %1680 = vsyncpa %s1679, 1
    %1681 = vsyncpa [#allocation10], 1
    %s1682 = scalar_lea.sflag [#allocation10], 1
    %1683 = vsyncpa %s1682, 1
    %1684 = vsyncpa [#allocation5], 1
    %s1685 = scalar_lea.sflag [#allocation5], 1
    %1686 = vsyncpa %s1685, 1
    %1687 = vsyncpa [#allocation13], 1
    %s1688 = scalar_lea.sflag [#allocation13], 1
    %1689 = vsyncpa %s1688, 1

</llo_original>
